<compile_context>
chip_gen: v6e
topology: v6e:2x2x1
jax: 0.10.0
libtpu: 0.0.40
codegen_flags: <defaults>
</compile_context>

<pallas_src>
import math
import functools

import jax
import jax.numpy as jnp
from jax.experimental import pallas as pl
from jax.experimental.pallas import tpu as pltpu


def _bilstm_kernel(x_ref, wx_ref, bx_ref, wh_ref, lens_ref, o_ref, *, T, B, H):
    """Fused bidirectional LSTM recurrence.

    x_ref   : (T*B, E)   bf16  time-major embedded rows
    wx_ref  : (E, 8H)    bf16  fused [fwd 4H | bwd 4H] input weights
    bx_ref  : (1, 8H)    f32   fused biases (b_ih + b_hh per direction)
    wh_ref  : (2H, 8H)   bf16  block-diag recurrent weights  [[Whf, 0], [0, Whb]]
    lens_ref: (B, 1)     int32 sequence lengths
    o_ref   : (B, T*2H)  f32   lane-dense output, row b = [f_0|b_0|f_1|b_1|...]
    """
    G4 = 4 * H

    # One fused, full-lane input projection for both directions
    # (bf16 operands, f32 accumulation on the MXU); biases folded in once.
    gall = (jnp.dot(x_ref[...], wx_ref[...], preferred_element_type=jnp.float32)
            + bx_ref[...])                                     # (T*B, 8H) f32

    wh = wh_ref[...]                                           # (2H, 8H) bf16
    lens = lens_ref[...]                                       # (B, 1) int32

    # Hoisted, recurrence-independent work (off the serial critical path):
    #   * per-timestep pack/pad masks
    #   * per-step fused input-gate blocks: fwd gates of time s next to bwd
    #     gates of time T-1-s (both directions are walked simultaneously).
    masks = [lens > t for t in range(T)]                       # T x (B, 1) bool
    gx = [jnp.concatenate([gall[s * B:(s + 1) * B, :G4],
                           gall[(T - 1 - s) * B:(T - s) * B, G4:]], axis=-1)
          for s in range(T)]                                   # T x (B, 8H) f32

    zeros = jnp.zeros((B, H), jnp.float32)
    h_f = zeros
    c_f = zeros
    h_b = zeros
    c_b = zeros
    outs_f = [None] * T
    outs_b = [None] * T

    for s in range(T):
        tf = s              # forward-direction timestep
        tb = T - 1 - s      # backward-direction timestep

        # Single block-diagonal recurrent matmul for BOTH directions:
        # (B, 2H) @ (2H, 8H) -> (B, 8H) == one full 128-lane MXU output tile.
        hcat = jnp.concatenate([h_f, h_b], axis=-1).astype(wh.dtype)
        g = gx[s] + jnp.dot(hcat, wh, preferred_element_type=jnp.float32)

        # Gate nonlinearities once over the whole 128-lane block
        # (PyTorch order [i|f|g|o] per direction), then per-dir cell math in f32.
        sg = jax.nn.sigmoid(g)
        th = jnp.tanh(g)

        c_f_new = sg[:, H:2 * H] * c_f + sg[:, 0:H] * th[:, 2 * H:3 * H]
        h_f_new = sg[:, 3 * H:G4] * jnp.tanh(c_f_new)

        c_b_new = (sg[:, G4 + H:G4 + 2 * H] * c_b
                   + sg[:, G4:G4 + H] * th[:, G4 + 2 * H:G4 + 3 * H])
        h_b_new = sg[:, G4 + 3 * H:] * jnp.tanh(c_b_new)

        mf = masks[tf]
        mb = masks[tb]
        h_f = jnp.where(mf, h_f_new, h_f)
        c_f = jnp.where(mf, c_f_new, c_f)
        h_b = jnp.where(mb, h_b_new, h_b)
        c_b = jnp.where(mb, c_b_new, c_b)
        outs_f[tf] = jnp.where(mf, h_f_new, 0.0)
        outs_b[tb] = jnp.where(mb, h_b_new, 0.0)

    # ONE lane-dense store: (B, T*2H). Row b holds [h_fwd(t) | h_bwd(t)] for
    # t = 0..T-1 back to back, so a free reshape in the wrapper yields
    # (B, T, 2H) directly (no separate XLA transpose kernel).
    pieces = []
    for t in range(T):
        pieces.append(outs_f[t])
        pieces.append(outs_b[t])
    o_ref[...] = jnp.concatenate(pieces, axis=-1).astype(o_ref.dtype)


def prepare_lstm_params(w_ih_f, w_hh_f, b_ih_f, b_hh_f,
                        w_ih_b, w_hh_b, b_ih_b, b_hh_b):
    """One-time host-side weight prep (outside the per-call jit path).

    Weights in PyTorch nn.LSTM layout: w_ih (4H, E), w_hh (4H, H), biases (4H,).
    Returns:
      wx : (E, 8H)  bf16  fused [fwd | bwd] input-projection weights
      bx : (1, 8H)  f32   fused biases (b_ih + b_hh per direction)
      wh : (2H, 8H) bf16  block-diag recurrent weights [[Whf, 0], [0, Whb]]
    """
    H = w_hh_f.shape[1]
    wx = jnp.concatenate([w_ih_f.T, w_ih_b.T], axis=1).astype(jnp.bfloat16)
    bx = jnp.concatenate([b_ih_f + b_hh_f, b_ih_b + b_hh_b]
                         ).reshape(1, 8 * H).astype(jnp.float32)
    wh = jnp.zeros((2 * H, 8 * H), jnp.float32)
    wh = wh.at[:H, :4 * H].set(w_hh_f.T)
    wh = wh.at[H:, 4 * H:].set(w_hh_b.T)
    wh = wh.astype(jnp.bfloat16)
    return wx, bx, wh


@jax.jit
def lstm_encoder_pallas(x, seq_lens, wx, bx, wh):
    """x: (B, T, E) float32; seq_lens: (B,) int (descending, max == T).
    wx/bx/wh: output of prepare_lstm_params.
    Returns (B, T, 2H) float32 (padded positions are exactly 0)."""
    B, T, E = x.shape
    H = wx.shape[1] // 8

    x_flat = jnp.transpose(x, (1, 0, 2)).reshape(T * B, E).astype(jnp.bfloat16)
    lens2d = seq_lens.astype(jnp.int32).reshape(B, 1)

    kernel = functools.partial(_bilstm_kernel, T=T, B=B, H=H)

    out = pl.pallas_call(
        kernel,
        out_shape=jax.ShapeDtypeStruct((B, T * 2 * H), jnp.float32),
        in_specs=[pl.BlockSpec(memory_space=pltpu.MemorySpace.VMEM)] * 5,
        out_specs=pl.BlockSpec(memory_space=pltpu.MemorySpace.VMEM),
    )(x_flat, wx, bx, wh, lens2d)

    return out.reshape(B, T, 2 * H)


def lstm_encoder_reference(x, seq_lens,
                           w_ih_f, w_hh_f, b_ih_f, b_hh_f,
                           w_ih_b, w_hh_b, b_ih_b, b_hh_b):
    """Pure-JAX f32 bidirectional LSTM with pack/pad masking (PyTorch gate order)."""
    B, T, E = x.shape
    H = w_hh_f.shape[1]

    def run_dir(w_ih, w_hh, b_ih, b_hh, reverse):
        h = jnp.zeros((B, H), jnp.float32)
        c = jnp.zeros((B, H), jnp.float32)
        outs = [None] * T
        order = range(T - 1, -1, -1) if reverse else range(T)
        for t in order:
            gates = x[:, t] @ w_ih.T + b_ih + h @ w_hh.T + b_hh      # (B, 4H)
            i = jax.nn.sigmoid(gates[:, 0:H])
            f = jax.nn.sigmoid(gates[:, H:2 * H])
            g = jnp.tanh(gates[:, 2 * H:3 * H])
            o = jax.nn.sigmoid(gates[:, 3 * H:4 * H])
            c_new = f * c + i * g
            h_new = o * jnp.tanh(c_new)
            m = (seq_lens > t)[:, None]
            h = jnp.where(m, h_new, h)
            c = jnp.where(m, c_new, c)
            outs[t] = jnp.where(m, h_new, jnp.zeros_like(h_new))
        return jnp.stack(outs, axis=1)                               # (B, T, H)

    fwd = run_dir(w_ih_f, w_hh_f, b_ih_f, b_hh_f, reverse=False)
    bwd = run_dir(w_ih_b, w_hh_b, b_ih_b, b_hh_b, reverse=True)
    return jnp.concatenate([fwd, bwd], axis=-1)


if __name__ == "__main__":
    # LSTMEncoder(embedding_dim=32, hidden_dim=32) -> per-direction H = 16.
    B, T, EMBED, HIDDEN = 2, 8, 32, 32
    H = HIDDEN // 2

    key = jax.random.PRNGKey(0)
    keys = jax.random.split(key, 9)

    x = jax.random.normal(keys[0], (B, T, EMBED), dtype=jnp.float32)
    # pack_padded_sequence requires descending lengths; max length == T.
    seq_lens = jnp.array([T, T - 3], dtype=jnp.int32)

    bound = 1.0 / math.sqrt(H)   # PyTorch nn.LSTM default init scale

    def u(k, shape):
        return jax.random.uniform(k, shape, jnp.float32, -bound, bound)

    w_ih_f = u(keys[1], (4 * H, EMBED))
    w_hh_f = u(keys[2], (4 * H, H))
    b_ih_f = u(keys[3], (4 * H,))
    b_hh_f = u(keys[4], (4 * H,))
    w_ih_b = u(keys[5], (4 * H, EMBED))
    w_hh_b = u(keys[6], (4 * H, H))
    b_ih_b = u(keys[7], (4 * H,))
    b_hh_b = u(keys[8], (4 * H,))

    wx, bx, wh = prepare_lstm_params(w_ih_f, w_hh_f, b_ih_f, b_hh_f,
                                     w_ih_b, w_hh_b, b_ih_b, b_hh_b)

    out = lstm_encoder_pallas(x, seq_lens, wx, bx, wh)
    out = jax.block_until_ready(out)

    ref = lstm_encoder_reference(x, seq_lens,
                                 w_ih_f, w_hh_f, b_ih_f, b_hh_f,
                                 w_ih_b, w_hh_b, b_ih_b, b_hh_b)

    assert out.shape == (B, T, HIDDEN), out.shape
    # bf16 MXU operands (f32 accumulation) vs the all-f32 reference -> loose tol.
    assert jnp.allclose(out, ref, atol=5e-2, rtol=5e-2), "mismatch vs reference"
    # padded positions (t >= seq_lens[b]) must be exactly zero, like pad_packed_sequence
    assert float(jnp.abs(out[1, T - 3:]).max()) == 0.0

    print("KERNEL_OK")
</pallas_src>

<mosaic_0001>
module attributes {stable_mosaic.version = 11 : i64} {
  func.func @_bilstm_kernel(%arg0: memref<16x32xbf16, #tpu.memory_space<vmem>>, %arg1: memref<32x128xbf16, #tpu.memory_space<vmem>>, %arg2: memref<1x128xf32, #tpu.memory_space<vmem>>, %arg3: memref<32x128xbf16, #tpu.memory_space<vmem>>, %arg4: memref<2x1xi32, #tpu.memory_space<vmem>>, %arg5: memref<2x256xf32, #tpu.memory_space<vmem>>) attributes {dimension_semantics = [], scalar_prefetch = 0 : i64, scratch_operands = 0 : i64, tpu.core_type = #tpu.core_type<tc>} {
    %c0 = arith.constant 0 : index
    %c0_0 = arith.constant 0 : index
    %0 = vector.load %arg0[%c0, %c0_0] : memref<16x32xbf16, #tpu.memory_space<vmem>>, vector<16x32xbf16>
    %c0_1 = arith.constant 0 : index
    %c0_2 = arith.constant 0 : index
    %1 = vector.load %arg1[%c0_1, %c0_2] : memref<32x128xbf16, #tpu.memory_space<vmem>>, vector<32x128xbf16>
    %cst = arith.constant dense<0.000000e+00> : vector<16x128xf32>
    %2 = tpu.matmul %0, %1, %cst {dimension_numbers = #tpu.dot_dimension_numbers<[1], [0], [0], [1], [0, 0, 1, 1], [], []>} : vector<16x32xbf16>, vector<32x128xbf16>, vector<16x128xf32> -> vector<16x128xf32>
    %c0_3 = arith.constant 0 : index
    %c0_4 = arith.constant 0 : index
    %3 = vector.load %arg2[%c0_3, %c0_4] : memref<1x128xf32, #tpu.memory_space<vmem>>, vector<1x128xf32>
    %4 = vector.broadcast %3 : vector<1x128xf32> to vector<16x128xf32>
    %5 = arith.addf %2, %4 : vector<16x128xf32>
    %c0_5 = arith.constant 0 : index
    %c0_6 = arith.constant 0 : index
    %6 = vector.load %arg3[%c0_5, %c0_6] : memref<32x128xbf16, #tpu.memory_space<vmem>>, vector<32x128xbf16>
    %c0_7 = arith.constant 0 : index
    %c0_8 = arith.constant 0 : index
    %7 = vector.load %arg4[%c0_7, %c0_8] : memref<2x1xi32, #tpu.memory_space<vmem>>, vector<2x1xi32>
    %c0_i32 = arith.constant 0 : i32
    %8 = vector.broadcast %c0_i32 : i32 to vector<2x1xi32>
    %9 = arith.cmpi sgt, %7, %8 : vector<2x1xi32>
    %c1_i32 = arith.constant 1 : i32
    %10 = vector.broadcast %c1_i32 : i32 to vector<2x1xi32>
    %11 = arith.cmpi sgt, %7, %10 : vector<2x1xi32>
    %c2_i32 = arith.constant 2 : i32
    %12 = vector.broadcast %c2_i32 : i32 to vector<2x1xi32>
    %13 = arith.cmpi sgt, %7, %12 : vector<2x1xi32>
    %c3_i32 = arith.constant 3 : i32
    %14 = vector.broadcast %c3_i32 : i32 to vector<2x1xi32>
    %15 = arith.cmpi sgt, %7, %14 : vector<2x1xi32>
    %c4_i32 = arith.constant 4 : i32
    %16 = vector.broadcast %c4_i32 : i32 to vector<2x1xi32>
    %17 = arith.cmpi sgt, %7, %16 : vector<2x1xi32>
    %c5_i32 = arith.constant 5 : i32
    %18 = vector.broadcast %c5_i32 : i32 to vector<2x1xi32>
    %19 = arith.cmpi sgt, %7, %18 : vector<2x1xi32>
    %c6_i32 = arith.constant 6 : i32
    %20 = vector.broadcast %c6_i32 : i32 to vector<2x1xi32>
    %21 = arith.cmpi sgt, %7, %20 : vector<2x1xi32>
    %c7_i32 = arith.constant 7 : i32
    %22 = vector.broadcast %c7_i32 : i32 to vector<2x1xi32>
    %23 = arith.cmpi sgt, %7, %22 : vector<2x1xi32>
    %24 = vector.extract_strided_slice %5 {offsets = [0, 0], sizes = [2, 64], strides = [1, 1]} : vector<16x128xf32> to vector<2x64xf32>
    %25 = vector.extract_strided_slice %5 {offsets = [14, 64], sizes = [2, 64], strides = [1, 1]} : vector<16x128xf32> to vector<2x64xf32>
    %26 = tpu.concatenate %24, %25 in 1 : vector<2x64xf32>, vector<2x64xf32> -> vector<2x128xf32>
    %27 = vector.extract_strided_slice %5 {offsets = [2, 0], sizes = [2, 64], strides = [1, 1]} : vector<16x128xf32> to vector<2x64xf32>
    %28 = vector.extract_strided_slice %5 {offsets = [12, 64], sizes = [2, 64], strides = [1, 1]} : vector<16x128xf32> to vector<2x64xf32>
    %29 = tpu.concatenate %27, %28 in 1 : vector<2x64xf32>, vector<2x64xf32> -> vector<2x128xf32>
    %30 = vector.extract_strided_slice %5 {offsets = [4, 0], sizes = [2, 64], strides = [1, 1]} : vector<16x128xf32> to vector<2x64xf32>
    %31 = vector.extract_strided_slice %5 {offsets = [10, 64], sizes = [2, 64], strides = [1, 1]} : vector<16x128xf32> to vector<2x64xf32>
    %32 = tpu.concatenate %30, %31 in 1 : vector<2x64xf32>, vector<2x64xf32> -> vector<2x128xf32>
    %33 = vector.extract_strided_slice %5 {offsets = [6, 0], sizes = [2, 64], strides = [1, 1]} : vector<16x128xf32> to vector<2x64xf32>
    %34 = vector.extract_strided_slice %5 {offsets = [8, 64], sizes = [2, 64], strides = [1, 1]} : vector<16x128xf32> to vector<2x64xf32>
    %35 = tpu.concatenate %33, %34 in 1 : vector<2x64xf32>, vector<2x64xf32> -> vector<2x128xf32>
    %36 = vector.extract_strided_slice %5 {offsets = [8, 0], sizes = [2, 64], strides = [1, 1]} : vector<16x128xf32> to vector<2x64xf32>
    %37 = vector.extract_strided_slice %5 {offsets = [6, 64], sizes = [2, 64], strides = [1, 1]} : vector<16x128xf32> to vector<2x64xf32>
    %38 = tpu.concatenate %36, %37 in 1 : vector<2x64xf32>, vector<2x64xf32> -> vector<2x128xf32>
    %39 = vector.extract_strided_slice %5 {offsets = [10, 0], sizes = [2, 64], strides = [1, 1]} : vector<16x128xf32> to vector<2x64xf32>
    %40 = vector.extract_strided_slice %5 {offsets = [4, 64], sizes = [2, 64], strides = [1, 1]} : vector<16x128xf32> to vector<2x64xf32>
    %41 = tpu.concatenate %39, %40 in 1 : vector<2x64xf32>, vector<2x64xf32> -> vector<2x128xf32>
    %42 = vector.extract_strided_slice %5 {offsets = [12, 0], sizes = [2, 64], strides = [1, 1]} : vector<16x128xf32> to vector<2x64xf32>
    %43 = vector.extract_strided_slice %5 {offsets = [2, 64], sizes = [2, 64], strides = [1, 1]} : vector<16x128xf32> to vector<2x64xf32>
    %44 = tpu.concatenate %42, %43 in 1 : vector<2x64xf32>, vector<2x64xf32> -> vector<2x128xf32>
    %45 = vector.extract_strided_slice %5 {offsets = [14, 0], sizes = [2, 64], strides = [1, 1]} : vector<16x128xf32> to vector<2x64xf32>
    %46 = vector.extract_strided_slice %5 {offsets = [0, 64], sizes = [2, 64], strides = [1, 1]} : vector<16x128xf32> to vector<2x64xf32>
    %47 = tpu.concatenate %45, %46 in 1 : vector<2x64xf32>, vector<2x64xf32> -> vector<2x128xf32>
    %cst_9 = arith.constant 0.000000e+00 : f32
    %48 = vector.broadcast %cst_9 : f32 to vector<2x16xf32>
    %49 = tpu.concatenate %48, %48 in 1 : vector<2x16xf32>, vector<2x16xf32> -> vector<2x32xf32>
    %50 = arith.truncf %49 : vector<2x32xf32> to vector<2x32xbf16>
    %cst_10 = arith.constant dense<0.000000e+00> : vector<2x128xf32>
    %51 = tpu.matmul %50, %6, %cst_10 {dimension_numbers = #tpu.dot_dimension_numbers<[1], [0], [0], [1], [0, 0, 1, 1], [], []>} : vector<2x32xbf16>, vector<32x128xbf16>, vector<2x128xf32> -> vector<2x128xf32>
    %52 = arith.addf %26, %51 : vector<2x128xf32>
    %53 = arith.negf %52 : vector<2x128xf32>
    %54 = math.exp %53 : vector<2x128xf32>
    %cst_11 = arith.constant 1.000000e+00 : f32
    %55 = vector.broadcast %cst_11 : f32 to vector<2x128xf32>
    %56 = arith.addf %55, %54 : vector<2x128xf32>
    %57 = arith.divf %55, %56 : vector<2x128xf32>
    %58 = math.tanh %52 : vector<2x128xf32>
    %59 = vector.extract_strided_slice %57 {offsets = [0, 16], sizes = [2, 16], strides = [1, 1]} : vector<2x128xf32> to vector<2x16xf32>
    %60 = arith.mulf %59, %48 : vector<2x16xf32>
    %61 = vector.extract_strided_slice %57 {offsets = [0, 0], sizes = [2, 16], strides = [1, 1]} : vector<2x128xf32> to vector<2x16xf32>
    %62 = vector.extract_strided_slice %58 {offsets = [0, 32], sizes = [2, 16], strides = [1, 1]} : vector<2x128xf32> to vector<2x16xf32>
    %63 = arith.mulf %61, %62 : vector<2x16xf32>
    %64 = arith.addf %60, %63 : vector<2x16xf32>
    %65 = vector.extract_strided_slice %57 {offsets = [0, 48], sizes = [2, 16], strides = [1, 1]} : vector<2x128xf32> to vector<2x16xf32>
    %66 = math.tanh %64 : vector<2x16xf32>
    %67 = arith.mulf %65, %66 : vector<2x16xf32>
    %68 = vector.extract_strided_slice %57 {offsets = [0, 80], sizes = [2, 16], strides = [1, 1]} : vector<2x128xf32> to vector<2x16xf32>
    %69 = arith.mulf %68, %48 : vector<2x16xf32>
    %70 = vector.extract_strided_slice %57 {offsets = [0, 64], sizes = [2, 16], strides = [1, 1]} : vector<2x128xf32> to vector<2x16xf32>
    %71 = vector.extract_strided_slice %58 {offsets = [0, 96], sizes = [2, 16], strides = [1, 1]} : vector<2x128xf32> to vector<2x16xf32>
    %72 = arith.mulf %70, %71 : vector<2x16xf32>
    %73 = arith.addf %69, %72 : vector<2x16xf32>
    %74 = vector.extract_strided_slice %57 {offsets = [0, 112], sizes = [2, 16], strides = [1, 1]} : vector<2x128xf32> to vector<2x16xf32>
    %75 = math.tanh %73 : vector<2x16xf32>
    %76 = arith.mulf %74, %75 : vector<2x16xf32>
    %77 = vector.shape_cast %9 : vector<2x1xi1> to vector<2x1xi1>
    %78 = vector.broadcast %77 : vector<2x1xi1> to vector<2x16xi1>
    %79 = arith.select %78, %67, %48 : vector<2x16xi1>, vector<2x16xf32>
    %80 = vector.shape_cast %9 : vector<2x1xi1> to vector<2x1xi1>
    %81 = vector.broadcast %80 : vector<2x1xi1> to vector<2x16xi1>
    %82 = arith.select %81, %64, %48 : vector<2x16xi1>, vector<2x16xf32>
    %83 = vector.shape_cast %23 : vector<2x1xi1> to vector<2x1xi1>
    %84 = vector.broadcast %83 : vector<2x1xi1> to vector<2x16xi1>
    %85 = arith.select %84, %76, %48 : vector<2x16xi1>, vector<2x16xf32>
    %86 = vector.shape_cast %23 : vector<2x1xi1> to vector<2x1xi1>
    %87 = vector.broadcast %86 : vector<2x1xi1> to vector<2x16xi1>
    %88 = arith.select %87, %73, %48 : vector<2x16xi1>, vector<2x16xf32>
    %cst_12 = arith.constant 0.000000e+00 : f32
    %89 = vector.shape_cast %9 : vector<2x1xi1> to vector<2x1xi1>
    %90 = vector.broadcast %89 : vector<2x1xi1> to vector<2x16xi1>
    %91 = vector.broadcast %cst_12 : f32 to vector<2x16xf32>
    %92 = arith.select %90, %67, %91 : vector<2x16xi1>, vector<2x16xf32>
    %cst_13 = arith.constant 0.000000e+00 : f32
    %93 = vector.shape_cast %23 : vector<2x1xi1> to vector<2x1xi1>
    %94 = vector.broadcast %93 : vector<2x1xi1> to vector<2x16xi1>
    %95 = vector.broadcast %cst_13 : f32 to vector<2x16xf32>
    %96 = arith.select %94, %76, %95 : vector<2x16xi1>, vector<2x16xf32>
    %97 = tpu.concatenate %79, %85 in 1 : vector<2x16xf32>, vector<2x16xf32> -> vector<2x32xf32>
    %98 = arith.truncf %97 : vector<2x32xf32> to vector<2x32xbf16>
    %cst_14 = arith.constant dense<0.000000e+00> : vector<2x128xf32>
    %99 = tpu.matmul %98, %6, %cst_14 {dimension_numbers = #tpu.dot_dimension_numbers<[1], [0], [0], [1], [0, 0, 1, 1], [], []>} : vector<2x32xbf16>, vector<32x128xbf16>, vector<2x128xf32> -> vector<2x128xf32>
    %100 = arith.addf %29, %99 : vector<2x128xf32>
    %101 = arith.negf %100 : vector<2x128xf32>
    %102 = math.exp %101 : vector<2x128xf32>
    %cst_15 = arith.constant 1.000000e+00 : f32
    %103 = vector.broadcast %cst_15 : f32 to vector<2x128xf32>
    %104 = arith.addf %103, %102 : vector<2x128xf32>
    %105 = arith.divf %103, %104 : vector<2x128xf32>
    %106 = math.tanh %100 : vector<2x128xf32>
    %107 = vector.extract_strided_slice %105 {offsets = [0, 16], sizes = [2, 16], strides = [1, 1]} : vector<2x128xf32> to vector<2x16xf32>
    %108 = arith.mulf %107, %82 : vector<2x16xf32>
    %109 = vector.extract_strided_slice %105 {offsets = [0, 0], sizes = [2, 16], strides = [1, 1]} : vector<2x128xf32> to vector<2x16xf32>
    %110 = vector.extract_strided_slice %106 {offsets = [0, 32], sizes = [2, 16], strides = [1, 1]} : vector<2x128xf32> to vector<2x16xf32>
    %111 = arith.mulf %109, %110 : vector<2x16xf32>
    %112 = arith.addf %108, %111 : vector<2x16xf32>
    %113 = vector.extract_strided_slice %105 {offsets = [0, 48], sizes = [2, 16], strides = [1, 1]} : vector<2x128xf32> to vector<2x16xf32>
    %114 = math.tanh %112 : vector<2x16xf32>
    %115 = arith.mulf %113, %114 : vector<2x16xf32>
    %116 = vector.extract_strided_slice %105 {offsets = [0, 80], sizes = [2, 16], strides = [1, 1]} : vector<2x128xf32> to vector<2x16xf32>
    %117 = arith.mulf %116, %88 : vector<2x16xf32>
    %118 = vector.extract_strided_slice %105 {offsets = [0, 64], sizes = [2, 16], strides = [1, 1]} : vector<2x128xf32> to vector<2x16xf32>
    %119 = vector.extract_strided_slice %106 {offsets = [0, 96], sizes = [2, 16], strides = [1, 1]} : vector<2x128xf32> to vector<2x16xf32>
    %120 = arith.mulf %118, %119 : vector<2x16xf32>
    %121 = arith.addf %117, %120 : vector<2x16xf32>
    %122 = vector.extract_strided_slice %105 {offsets = [0, 112], sizes = [2, 16], strides = [1, 1]} : vector<2x128xf32> to vector<2x16xf32>
    %123 = math.tanh %121 : vector<2x16xf32>
    %124 = arith.mulf %122, %123 : vector<2x16xf32>
    %125 = vector.shape_cast %11 : vector<2x1xi1> to vector<2x1xi1>
    %126 = vector.broadcast %125 : vector<2x1xi1> to vector<2x16xi1>
    %127 = arith.select %126, %115, %79 : vector<2x16xi1>, vector<2x16xf32>
    %128 = vector.shape_cast %11 : vector<2x1xi1> to vector<2x1xi1>
    %129 = vector.broadcast %128 : vector<2x1xi1> to vector<2x16xi1>
    %130 = arith.select %129, %112, %82 : vector<2x16xi1>, vector<2x16xf32>
    %131 = vector.shape_cast %21 : vector<2x1xi1> to vector<2x1xi1>
    %132 = vector.broadcast %131 : vector<2x1xi1> to vector<2x16xi1>
    %133 = arith.select %132, %124, %85 : vector<2x16xi1>, vector<2x16xf32>
    %134 = vector.shape_cast %21 : vector<2x1xi1> to vector<2x1xi1>
    %135 = vector.broadcast %134 : vector<2x1xi1> to vector<2x16xi1>
    %136 = arith.select %135, %121, %88 : vector<2x16xi1>, vector<2x16xf32>
    %cst_16 = arith.constant 0.000000e+00 : f32
    %137 = vector.shape_cast %11 : vector<2x1xi1> to vector<2x1xi1>
    %138 = vector.broadcast %137 : vector<2x1xi1> to vector<2x16xi1>
    %139 = vector.broadcast %cst_16 : f32 to vector<2x16xf32>
    %140 = arith.select %138, %115, %139 : vector<2x16xi1>, vector<2x16xf32>
    %cst_17 = arith.constant 0.000000e+00 : f32
    %141 = vector.shape_cast %21 : vector<2x1xi1> to vector<2x1xi1>
    %142 = vector.broadcast %141 : vector<2x1xi1> to vector<2x16xi1>
    %143 = vector.broadcast %cst_17 : f32 to vector<2x16xf32>
    %144 = arith.select %142, %124, %143 : vector<2x16xi1>, vector<2x16xf32>
    %145 = tpu.concatenate %127, %133 in 1 : vector<2x16xf32>, vector<2x16xf32> -> vector<2x32xf32>
    %146 = arith.truncf %145 : vector<2x32xf32> to vector<2x32xbf16>
    %cst_18 = arith.constant dense<0.000000e+00> : vector<2x128xf32>
    %147 = tpu.matmul %146, %6, %cst_18 {dimension_numbers = #tpu.dot_dimension_numbers<[1], [0], [0], [1], [0, 0, 1, 1], [], []>} : vector<2x32xbf16>, vector<32x128xbf16>, vector<2x128xf32> -> vector<2x128xf32>
    %148 = arith.addf %32, %147 : vector<2x128xf32>
    %149 = arith.negf %148 : vector<2x128xf32>
    %150 = math.exp %149 : vector<2x128xf32>
    %cst_19 = arith.constant 1.000000e+00 : f32
    %151 = vector.broadcast %cst_19 : f32 to vector<2x128xf32>
    %152 = arith.addf %151, %150 : vector<2x128xf32>
    %153 = arith.divf %151, %152 : vector<2x128xf32>
    %154 = math.tanh %148 : vector<2x128xf32>
    %155 = vector.extract_strided_slice %153 {offsets = [0, 16], sizes = [2, 16], strides = [1, 1]} : vector<2x128xf32> to vector<2x16xf32>
    %156 = arith.mulf %155, %130 : vector<2x16xf32>
    %157 = vector.extract_strided_slice %153 {offsets = [0, 0], sizes = [2, 16], strides = [1, 1]} : vector<2x128xf32> to vector<2x16xf32>
    %158 = vector.extract_strided_slice %154 {offsets = [0, 32], sizes = [2, 16], strides = [1, 1]} : vector<2x128xf32> to vector<2x16xf32>
    %159 = arith.mulf %157, %158 : vector<2x16xf32>
    %160 = arith.addf %156, %159 : vector<2x16xf32>
    %161 = vector.extract_strided_slice %153 {offsets = [0, 48], sizes = [2, 16], strides = [1, 1]} : vector<2x128xf32> to vector<2x16xf32>
    %162 = math.tanh %160 : vector<2x16xf32>
    %163 = arith.mulf %161, %162 : vector<2x16xf32>
    %164 = vector.extract_strided_slice %153 {offsets = [0, 80], sizes = [2, 16], strides = [1, 1]} : vector<2x128xf32> to vector<2x16xf32>
    %165 = arith.mulf %164, %136 : vector<2x16xf32>
    %166 = vector.extract_strided_slice %153 {offsets = [0, 64], sizes = [2, 16], strides = [1, 1]} : vector<2x128xf32> to vector<2x16xf32>
    %167 = vector.extract_strided_slice %154 {offsets = [0, 96], sizes = [2, 16], strides = [1, 1]} : vector<2x128xf32> to vector<2x16xf32>
    %168 = arith.mulf %166, %167 : vector<2x16xf32>
    %169 = arith.addf %165, %168 : vector<2x16xf32>
    %170 = vector.extract_strided_slice %153 {offsets = [0, 112], sizes = [2, 16], strides = [1, 1]} : vector<2x128xf32> to vector<2x16xf32>
    %171 = math.tanh %169 : vector<2x16xf32>
    %172 = arith.mulf %170, %171 : vector<2x16xf32>
    %173 = vector.shape_cast %13 : vector<2x1xi1> to vector<2x1xi1>
    %174 = vector.broadcast %173 : vector<2x1xi1> to vector<2x16xi1>
    %175 = arith.select %174, %163, %127 : vector<2x16xi1>, vector<2x16xf32>
    %176 = vector.shape_cast %13 : vector<2x1xi1> to vector<2x1xi1>
    %177 = vector.broadcast %176 : vector<2x1xi1> to vector<2x16xi1>
    %178 = arith.select %177, %160, %130 : vector<2x16xi1>, vector<2x16xf32>
    %179 = vector.shape_cast %19 : vector<2x1xi1> to vector<2x1xi1>
    %180 = vector.broadcast %179 : vector<2x1xi1> to vector<2x16xi1>
    %181 = arith.select %180, %172, %133 : vector<2x16xi1>, vector<2x16xf32>
    %182 = vector.shape_cast %19 : vector<2x1xi1> to vector<2x1xi1>
    %183 = vector.broadcast %182 : vector<2x1xi1> to vector<2x16xi1>
    %184 = arith.select %183, %169, %136 : vector<2x16xi1>, vector<2x16xf32>
    %cst_20 = arith.constant 0.000000e+00 : f32
    %185 = vector.shape_cast %13 : vector<2x1xi1> to vector<2x1xi1>
    %186 = vector.broadcast %185 : vector<2x1xi1> to vector<2x16xi1>
    %187 = vector.broadcast %cst_20 : f32 to vector<2x16xf32>
    %188 = arith.select %186, %163, %187 : vector<2x16xi1>, vector<2x16xf32>
    %cst_21 = arith.constant 0.000000e+00 : f32
    %189 = vector.shape_cast %19 : vector<2x1xi1> to vector<2x1xi1>
    %190 = vector.broadcast %189 : vector<2x1xi1> to vector<2x16xi1>
    %191 = vector.broadcast %cst_21 : f32 to vector<2x16xf32>
    %192 = arith.select %190, %172, %191 : vector<2x16xi1>, vector<2x16xf32>
    %193 = tpu.concatenate %175, %181 in 1 : vector<2x16xf32>, vector<2x16xf32> -> vector<2x32xf32>
    %194 = arith.truncf %193 : vector<2x32xf32> to vector<2x32xbf16>
    %cst_22 = arith.constant dense<0.000000e+00> : vector<2x128xf32>
    %195 = tpu.matmul %194, %6, %cst_22 {dimension_numbers = #tpu.dot_dimension_numbers<[1], [0], [0], [1], [0, 0, 1, 1], [], []>} : vector<2x32xbf16>, vector<32x128xbf16>, vector<2x128xf32> -> vector<2x128xf32>
    %196 = arith.addf %35, %195 : vector<2x128xf32>
    %197 = arith.negf %196 : vector<2x128xf32>
    %198 = math.exp %197 : vector<2x128xf32>
    %cst_23 = arith.constant 1.000000e+00 : f32
    %199 = vector.broadcast %cst_23 : f32 to vector<2x128xf32>
    %200 = arith.addf %199, %198 : vector<2x128xf32>
    %201 = arith.divf %199, %200 : vector<2x128xf32>
    %202 = math.tanh %196 : vector<2x128xf32>
    %203 = vector.extract_strided_slice %201 {offsets = [0, 16], sizes = [2, 16], strides = [1, 1]} : vector<2x128xf32> to vector<2x16xf32>
    %204 = arith.mulf %203, %178 : vector<2x16xf32>
    %205 = vector.extract_strided_slice %201 {offsets = [0, 0], sizes = [2, 16], strides = [1, 1]} : vector<2x128xf32> to vector<2x16xf32>
    %206 = vector.extract_strided_slice %202 {offsets = [0, 32], sizes = [2, 16], strides = [1, 1]} : vector<2x128xf32> to vector<2x16xf32>
    %207 = arith.mulf %205, %206 : vector<2x16xf32>
    %208 = arith.addf %204, %207 : vector<2x16xf32>
    %209 = vector.extract_strided_slice %201 {offsets = [0, 48], sizes = [2, 16], strides = [1, 1]} : vector<2x128xf32> to vector<2x16xf32>
    %210 = math.tanh %208 : vector<2x16xf32>
    %211 = arith.mulf %209, %210 : vector<2x16xf32>
    %212 = vector.extract_strided_slice %201 {offsets = [0, 80], sizes = [2, 16], strides = [1, 1]} : vector<2x128xf32> to vector<2x16xf32>
    %213 = arith.mulf %212, %184 : vector<2x16xf32>
    %214 = vector.extract_strided_slice %201 {offsets = [0, 64], sizes = [2, 16], strides = [1, 1]} : vector<2x128xf32> to vector<2x16xf32>
    %215 = vector.extract_strided_slice %202 {offsets = [0, 96], sizes = [2, 16], strides = [1, 1]} : vector<2x128xf32> to vector<2x16xf32>
    %216 = arith.mulf %214, %215 : vector<2x16xf32>
    %217 = arith.addf %213, %216 : vector<2x16xf32>
    %218 = vector.extract_strided_slice %201 {offsets = [0, 112], sizes = [2, 16], strides = [1, 1]} : vector<2x128xf32> to vector<2x16xf32>
    %219 = math.tanh %217 : vector<2x16xf32>
    %220 = arith.mulf %218, %219 : vector<2x16xf32>
    %221 = vector.shape_cast %15 : vector<2x1xi1> to vector<2x1xi1>
    %222 = vector.broadcast %221 : vector<2x1xi1> to vector<2x16xi1>
    %223 = arith.select %222, %211, %175 : vector<2x16xi1>, vector<2x16xf32>
    %224 = vector.shape_cast %15 : vector<2x1xi1> to vector<2x1xi1>
    %225 = vector.broadcast %224 : vector<2x1xi1> to vector<2x16xi1>
    %226 = arith.select %225, %208, %178 : vector<2x16xi1>, vector<2x16xf32>
    %227 = vector.shape_cast %17 : vector<2x1xi1> to vector<2x1xi1>
    %228 = vector.broadcast %227 : vector<2x1xi1> to vector<2x16xi1>
    %229 = arith.select %228, %220, %181 : vector<2x16xi1>, vector<2x16xf32>
    %230 = vector.shape_cast %17 : vector<2x1xi1> to vector<2x1xi1>
    %231 = vector.broadcast %230 : vector<2x1xi1> to vector<2x16xi1>
    %232 = arith.select %231, %217, %184 : vector<2x16xi1>, vector<2x16xf32>
    %cst_24 = arith.constant 0.000000e+00 : f32
    %233 = vector.shape_cast %15 : vector<2x1xi1> to vector<2x1xi1>
    %234 = vector.broadcast %233 : vector<2x1xi1> to vector<2x16xi1>
    %235 = vector.broadcast %cst_24 : f32 to vector<2x16xf32>
    %236 = arith.select %234, %211, %235 : vector<2x16xi1>, vector<2x16xf32>
    %cst_25 = arith.constant 0.000000e+00 : f32
    %237 = vector.shape_cast %17 : vector<2x1xi1> to vector<2x1xi1>
    %238 = vector.broadcast %237 : vector<2x1xi1> to vector<2x16xi1>
    %239 = vector.broadcast %cst_25 : f32 to vector<2x16xf32>
    %240 = arith.select %238, %220, %239 : vector<2x16xi1>, vector<2x16xf32>
    %241 = tpu.concatenate %223, %229 in 1 : vector<2x16xf32>, vector<2x16xf32> -> vector<2x32xf32>
    %242 = arith.truncf %241 : vector<2x32xf32> to vector<2x32xbf16>
    %cst_26 = arith.constant dense<0.000000e+00> : vector<2x128xf32>
    %243 = tpu.matmul %242, %6, %cst_26 {dimension_numbers = #tpu.dot_dimension_numbers<[1], [0], [0], [1], [0, 0, 1, 1], [], []>} : vector<2x32xbf16>, vector<32x128xbf16>, vector<2x128xf32> -> vector<2x128xf32>
    %244 = arith.addf %38, %243 : vector<2x128xf32>
    %245 = arith.negf %244 : vector<2x128xf32>
    %246 = math.exp %245 : vector<2x128xf32>
    %cst_27 = arith.constant 1.000000e+00 : f32
    %247 = vector.broadcast %cst_27 : f32 to vector<2x128xf32>
    %248 = arith.addf %247, %246 : vector<2x128xf32>
    %249 = arith.divf %247, %248 : vector<2x128xf32>
    %250 = math.tanh %244 : vector<2x128xf32>
    %251 = vector.extract_strided_slice %249 {offsets = [0, 16], sizes = [2, 16], strides = [1, 1]} : vector<2x128xf32> to vector<2x16xf32>
    %252 = arith.mulf %251, %226 : vector<2x16xf32>
    %253 = vector.extract_strided_slice %249 {offsets = [0, 0], sizes = [2, 16], strides = [1, 1]} : vector<2x128xf32> to vector<2x16xf32>
    %254 = vector.extract_strided_slice %250 {offsets = [0, 32], sizes = [2, 16], strides = [1, 1]} : vector<2x128xf32> to vector<2x16xf32>
    %255 = arith.mulf %253, %254 : vector<2x16xf32>
    %256 = arith.addf %252, %255 : vector<2x16xf32>
    %257 = vector.extract_strided_slice %249 {offsets = [0, 48], sizes = [2, 16], strides = [1, 1]} : vector<2x128xf32> to vector<2x16xf32>
    %258 = math.tanh %256 : vector<2x16xf32>
    %259 = arith.mulf %257, %258 : vector<2x16xf32>
    %260 = vector.extract_strided_slice %249 {offsets = [0, 80], sizes = [2, 16], strides = [1, 1]} : vector<2x128xf32> to vector<2x16xf32>
    %261 = arith.mulf %260, %232 : vector<2x16xf32>
    %262 = vector.extract_strided_slice %249 {offsets = [0, 64], sizes = [2, 16], strides = [1, 1]} : vector<2x128xf32> to vector<2x16xf32>
    %263 = vector.extract_strided_slice %250 {offsets = [0, 96], sizes = [2, 16], strides = [1, 1]} : vector<2x128xf32> to vector<2x16xf32>
    %264 = arith.mulf %262, %263 : vector<2x16xf32>
    %265 = arith.addf %261, %264 : vector<2x16xf32>
    %266 = vector.extract_strided_slice %249 {offsets = [0, 112], sizes = [2, 16], strides = [1, 1]} : vector<2x128xf32> to vector<2x16xf32>
    %267 = math.tanh %265 : vector<2x16xf32>
    %268 = arith.mulf %266, %267 : vector<2x16xf32>
    %269 = vector.shape_cast %17 : vector<2x1xi1> to vector<2x1xi1>
    %270 = vector.broadcast %269 : vector<2x1xi1> to vector<2x16xi1>
    %271 = arith.select %270, %259, %223 : vector<2x16xi1>, vector<2x16xf32>
    %272 = vector.shape_cast %17 : vector<2x1xi1> to vector<2x1xi1>
    %273 = vector.broadcast %272 : vector<2x1xi1> to vector<2x16xi1>
    %274 = arith.select %273, %256, %226 : vector<2x16xi1>, vector<2x16xf32>
    %275 = vector.shape_cast %15 : vector<2x1xi1> to vector<2x1xi1>
    %276 = vector.broadcast %275 : vector<2x1xi1> to vector<2x16xi1>
    %277 = arith.select %276, %268, %229 : vector<2x16xi1>, vector<2x16xf32>
    %278 = vector.shape_cast %15 : vector<2x1xi1> to vector<2x1xi1>
    %279 = vector.broadcast %278 : vector<2x1xi1> to vector<2x16xi1>
    %280 = arith.select %279, %265, %232 : vector<2x16xi1>, vector<2x16xf32>
    %cst_28 = arith.constant 0.000000e+00 : f32
    %281 = vector.shape_cast %17 : vector<2x1xi1> to vector<2x1xi1>
    %282 = vector.broadcast %281 : vector<2x1xi1> to vector<2x16xi1>
    %283 = vector.broadcast %cst_28 : f32 to vector<2x16xf32>
    %284 = arith.select %282, %259, %283 : vector<2x16xi1>, vector<2x16xf32>
    %cst_29 = arith.constant 0.000000e+00 : f32
    %285 = vector.shape_cast %15 : vector<2x1xi1> to vector<2x1xi1>
    %286 = vector.broadcast %285 : vector<2x1xi1> to vector<2x16xi1>
    %287 = vector.broadcast %cst_29 : f32 to vector<2x16xf32>
    %288 = arith.select %286, %268, %287 : vector<2x16xi1>, vector<2x16xf32>
    %289 = tpu.concatenate %271, %277 in 1 : vector<2x16xf32>, vector<2x16xf32> -> vector<2x32xf32>
    %290 = arith.truncf %289 : vector<2x32xf32> to vector<2x32xbf16>
    %cst_30 = arith.constant dense<0.000000e+00> : vector<2x128xf32>
    %291 = tpu.matmul %290, %6, %cst_30 {dimension_numbers = #tpu.dot_dimension_numbers<[1], [0], [0], [1], [0, 0, 1, 1], [], []>} : vector<2x32xbf16>, vector<32x128xbf16>, vector<2x128xf32> -> vector<2x128xf32>
    %292 = arith.addf %41, %291 : vector<2x128xf32>
    %293 = arith.negf %292 : vector<2x128xf32>
    %294 = math.exp %293 : vector<2x128xf32>
    %cst_31 = arith.constant 1.000000e+00 : f32
    %295 = vector.broadcast %cst_31 : f32 to vector<2x128xf32>
    %296 = arith.addf %295, %294 : vector<2x128xf32>
    %297 = arith.divf %295, %296 : vector<2x128xf32>
    %298 = math.tanh %292 : vector<2x128xf32>
    %299 = vector.extract_strided_slice %297 {offsets = [0, 16], sizes = [2, 16], strides = [1, 1]} : vector<2x128xf32> to vector<2x16xf32>
    %300 = arith.mulf %299, %274 : vector<2x16xf32>
    %301 = vector.extract_strided_slice %297 {offsets = [0, 0], sizes = [2, 16], strides = [1, 1]} : vector<2x128xf32> to vector<2x16xf32>
    %302 = vector.extract_strided_slice %298 {offsets = [0, 32], sizes = [2, 16], strides = [1, 1]} : vector<2x128xf32> to vector<2x16xf32>
    %303 = arith.mulf %301, %302 : vector<2x16xf32>
    %304 = arith.addf %300, %303 : vector<2x16xf32>
    %305 = vector.extract_strided_slice %297 {offsets = [0, 48], sizes = [2, 16], strides = [1, 1]} : vector<2x128xf32> to vector<2x16xf32>
    %306 = math.tanh %304 : vector<2x16xf32>
    %307 = arith.mulf %305, %306 : vector<2x16xf32>
    %308 = vector.extract_strided_slice %297 {offsets = [0, 80], sizes = [2, 16], strides = [1, 1]} : vector<2x128xf32> to vector<2x16xf32>
    %309 = arith.mulf %308, %280 : vector<2x16xf32>
    %310 = vector.extract_strided_slice %297 {offsets = [0, 64], sizes = [2, 16], strides = [1, 1]} : vector<2x128xf32> to vector<2x16xf32>
    %311 = vector.extract_strided_slice %298 {offsets = [0, 96], sizes = [2, 16], strides = [1, 1]} : vector<2x128xf32> to vector<2x16xf32>
    %312 = arith.mulf %310, %311 : vector<2x16xf32>
    %313 = arith.addf %309, %312 : vector<2x16xf32>
    %314 = vector.extract_strided_slice %297 {offsets = [0, 112], sizes = [2, 16], strides = [1, 1]} : vector<2x128xf32> to vector<2x16xf32>
    %315 = math.tanh %313 : vector<2x16xf32>
    %316 = arith.mulf %314, %315 : vector<2x16xf32>
    %317 = vector.shape_cast %19 : vector<2x1xi1> to vector<2x1xi1>
    %318 = vector.broadcast %317 : vector<2x1xi1> to vector<2x16xi1>
    %319 = arith.select %318, %307, %271 : vector<2x16xi1>, vector<2x16xf32>
    %320 = vector.shape_cast %19 : vector<2x1xi1> to vector<2x1xi1>
    %321 = vector.broadcast %320 : vector<2x1xi1> to vector<2x16xi1>
    %322 = arith.select %321, %304, %274 : vector<2x16xi1>, vector<2x16xf32>
    %323 = vector.shape_cast %13 : vector<2x1xi1> to vector<2x1xi1>
    %324 = vector.broadcast %323 : vector<2x1xi1> to vector<2x16xi1>
    %325 = arith.select %324, %316, %277 : vector<2x16xi1>, vector<2x16xf32>
    %326 = vector.shape_cast %13 : vector<2x1xi1> to vector<2x1xi1>
    %327 = vector.broadcast %326 : vector<2x1xi1> to vector<2x16xi1>
    %328 = arith.select %327, %313, %280 : vector<2x16xi1>, vector<2x16xf32>
    %cst_32 = arith.constant 0.000000e+00 : f32
    %329 = vector.shape_cast %19 : vector<2x1xi1> to vector<2x1xi1>
    %330 = vector.broadcast %329 : vector<2x1xi1> to vector<2x16xi1>
    %331 = vector.broadcast %cst_32 : f32 to vector<2x16xf32>
    %332 = arith.select %330, %307, %331 : vector<2x16xi1>, vector<2x16xf32>
    %cst_33 = arith.constant 0.000000e+00 : f32
    %333 = vector.shape_cast %13 : vector<2x1xi1> to vector<2x1xi1>
    %334 = vector.broadcast %333 : vector<2x1xi1> to vector<2x16xi1>
    %335 = vector.broadcast %cst_33 : f32 to vector<2x16xf32>
    %336 = arith.select %334, %316, %335 : vector<2x16xi1>, vector<2x16xf32>
    %337 = tpu.concatenate %319, %325 in 1 : vector<2x16xf32>, vector<2x16xf32> -> vector<2x32xf32>
    %338 = arith.truncf %337 : vector<2x32xf32> to vector<2x32xbf16>
    %cst_34 = arith.constant dense<0.000000e+00> : vector<2x128xf32>
    %339 = tpu.matmul %338, %6, %cst_34 {dimension_numbers = #tpu.dot_dimension_numbers<[1], [0], [0], [1], [0, 0, 1, 1], [], []>} : vector<2x32xbf16>, vector<32x128xbf16>, vector<2x128xf32> -> vector<2x128xf32>
    %340 = arith.addf %44, %339 : vector<2x128xf32>
    %341 = arith.negf %340 : vector<2x128xf32>
    %342 = math.exp %341 : vector<2x128xf32>
    %cst_35 = arith.constant 1.000000e+00 : f32
    %343 = vector.broadcast %cst_35 : f32 to vector<2x128xf32>
    %344 = arith.addf %343, %342 : vector<2x128xf32>
    %345 = arith.divf %343, %344 : vector<2x128xf32>
    %346 = math.tanh %340 : vector<2x128xf32>
    %347 = vector.extract_strided_slice %345 {offsets = [0, 16], sizes = [2, 16], strides = [1, 1]} : vector<2x128xf32> to vector<2x16xf32>
    %348 = arith.mulf %347, %322 : vector<2x16xf32>
    %349 = vector.extract_strided_slice %345 {offsets = [0, 0], sizes = [2, 16], strides = [1, 1]} : vector<2x128xf32> to vector<2x16xf32>
    %350 = vector.extract_strided_slice %346 {offsets = [0, 32], sizes = [2, 16], strides = [1, 1]} : vector<2x128xf32> to vector<2x16xf32>
    %351 = arith.mulf %349, %350 : vector<2x16xf32>
    %352 = arith.addf %348, %351 : vector<2x16xf32>
    %353 = vector.extract_strided_slice %345 {offsets = [0, 48], sizes = [2, 16], strides = [1, 1]} : vector<2x128xf32> to vector<2x16xf32>
    %354 = math.tanh %352 : vector<2x16xf32>
    %355 = arith.mulf %353, %354 : vector<2x16xf32>
    %356 = vector.extract_strided_slice %345 {offsets = [0, 80], sizes = [2, 16], strides = [1, 1]} : vector<2x128xf32> to vector<2x16xf32>
    %357 = arith.mulf %356, %328 : vector<2x16xf32>
    %358 = vector.extract_strided_slice %345 {offsets = [0, 64], sizes = [2, 16], strides = [1, 1]} : vector<2x128xf32> to vector<2x16xf32>
    %359 = vector.extract_strided_slice %346 {offsets = [0, 96], sizes = [2, 16], strides = [1, 1]} : vector<2x128xf32> to vector<2x16xf32>
    %360 = arith.mulf %358, %359 : vector<2x16xf32>
    %361 = arith.addf %357, %360 : vector<2x16xf32>
    %362 = vector.extract_strided_slice %345 {offsets = [0, 112], sizes = [2, 16], strides = [1, 1]} : vector<2x128xf32> to vector<2x16xf32>
    %363 = math.tanh %361 : vector<2x16xf32>
    %364 = arith.mulf %362, %363 : vector<2x16xf32>
    %365 = vector.shape_cast %21 : vector<2x1xi1> to vector<2x1xi1>
    %366 = vector.broadcast %365 : vector<2x1xi1> to vector<2x16xi1>
    %367 = arith.select %366, %355, %319 : vector<2x16xi1>, vector<2x16xf32>
    %368 = vector.shape_cast %21 : vector<2x1xi1> to vector<2x1xi1>
    %369 = vector.broadcast %368 : vector<2x1xi1> to vector<2x16xi1>
    %370 = arith.select %369, %352, %322 : vector<2x16xi1>, vector<2x16xf32>
    %371 = vector.shape_cast %11 : vector<2x1xi1> to vector<2x1xi1>
    %372 = vector.broadcast %371 : vector<2x1xi1> to vector<2x16xi1>
    %373 = arith.select %372, %364, %325 : vector<2x16xi1>, vector<2x16xf32>
    %374 = vector.shape_cast %11 : vector<2x1xi1> to vector<2x1xi1>
    %375 = vector.broadcast %374 : vector<2x1xi1> to vector<2x16xi1>
    %376 = arith.select %375, %361, %328 : vector<2x16xi1>, vector<2x16xf32>
    %cst_36 = arith.constant 0.000000e+00 : f32
    %377 = vector.shape_cast %21 : vector<2x1xi1> to vector<2x1xi1>
    %378 = vector.broadcast %377 : vector<2x1xi1> to vector<2x16xi1>
    %379 = vector.broadcast %cst_36 : f32 to vector<2x16xf32>
    %380 = arith.select %378, %355, %379 : vector<2x16xi1>, vector<2x16xf32>
    %cst_37 = arith.constant 0.000000e+00 : f32
    %381 = vector.shape_cast %11 : vector<2x1xi1> to vector<2x1xi1>
    %382 = vector.broadcast %381 : vector<2x1xi1> to vector<2x16xi1>
    %383 = vector.broadcast %cst_37 : f32 to vector<2x16xf32>
    %384 = arith.select %382, %364, %383 : vector<2x16xi1>, vector<2x16xf32>
    %385 = tpu.concatenate %367, %373 in 1 : vector<2x16xf32>, vector<2x16xf32> -> vector<2x32xf32>
    %386 = arith.truncf %385 : vector<2x32xf32> to vector<2x32xbf16>
    %cst_38 = arith.constant dense<0.000000e+00> : vector<2x128xf32>
    %387 = tpu.matmul %386, %6, %cst_38 {dimension_numbers = #tpu.dot_dimension_numbers<[1], [0], [0], [1], [0, 0, 1, 1], [], []>} : vector<2x32xbf16>, vector<32x128xbf16>, vector<2x128xf32> -> vector<2x128xf32>
    %388 = arith.addf %47, %387 : vector<2x128xf32>
    %389 = arith.negf %388 : vector<2x128xf32>
    %390 = math.exp %389 : vector<2x128xf32>
    %cst_39 = arith.constant 1.000000e+00 : f32
    %391 = vector.broadcast %cst_39 : f32 to vector<2x128xf32>
    %392 = arith.addf %391, %390 : vector<2x128xf32>
    %393 = arith.divf %391, %392 : vector<2x128xf32>
    %394 = math.tanh %388 : vector<2x128xf32>
    %395 = vector.extract_strided_slice %393 {offsets = [0, 16], sizes = [2, 16], strides = [1, 1]} : vector<2x128xf32> to vector<2x16xf32>
    %396 = arith.mulf %395, %370 : vector<2x16xf32>
    %397 = vector.extract_strided_slice %393 {offsets = [0, 0], sizes = [2, 16], strides = [1, 1]} : vector<2x128xf32> to vector<2x16xf32>
    %398 = vector.extract_strided_slice %394 {offsets = [0, 32], sizes = [2, 16], strides = [1, 1]} : vector<2x128xf32> to vector<2x16xf32>
    %399 = arith.mulf %397, %398 : vector<2x16xf32>
    %400 = arith.addf %396, %399 : vector<2x16xf32>
    %401 = vector.extract_strided_slice %393 {offsets = [0, 48], sizes = [2, 16], strides = [1, 1]} : vector<2x128xf32> to vector<2x16xf32>
    %402 = math.tanh %400 : vector<2x16xf32>
    %403 = arith.mulf %401, %402 : vector<2x16xf32>
    %404 = vector.extract_strided_slice %393 {offsets = [0, 80], sizes = [2, 16], strides = [1, 1]} : vector<2x128xf32> to vector<2x16xf32>
    %405 = arith.mulf %404, %376 : vector<2x16xf32>
    %406 = vector.extract_strided_slice %393 {offsets = [0, 64], sizes = [2, 16], strides = [1, 1]} : vector<2x128xf32> to vector<2x16xf32>
    %407 = vector.extract_strided_slice %394 {offsets = [0, 96], sizes = [2, 16], strides = [1, 1]} : vector<2x128xf32> to vector<2x16xf32>
    %408 = arith.mulf %406, %407 : vector<2x16xf32>
    %409 = arith.addf %405, %408 : vector<2x16xf32>
    %410 = vector.extract_strided_slice %393 {offsets = [0, 112], sizes = [2, 16], strides = [1, 1]} : vector<2x128xf32> to vector<2x16xf32>
    %411 = math.tanh %409 : vector<2x16xf32>
    %412 = arith.mulf %410, %411 : vector<2x16xf32>
    %cst_40 = arith.constant 0.000000e+00 : f32
    %413 = vector.shape_cast %23 : vector<2x1xi1> to vector<2x1xi1>
    %414 = vector.broadcast %413 : vector<2x1xi1> to vector<2x16xi1>
    %415 = vector.broadcast %cst_40 : f32 to vector<2x16xf32>
    %416 = arith.select %414, %403, %415 : vector<2x16xi1>, vector<2x16xf32>
    %cst_41 = arith.constant 0.000000e+00 : f32
    %417 = vector.shape_cast %9 : vector<2x1xi1> to vector<2x1xi1>
    %418 = vector.broadcast %417 : vector<2x1xi1> to vector<2x16xi1>
    %419 = vector.broadcast %cst_41 : f32 to vector<2x16xf32>
    %420 = arith.select %418, %412, %419 : vector<2x16xi1>, vector<2x16xf32>
    %421 = tpu.concatenate %92, %420, %140, %384, %188, %336, %236, %288, %284, %240, %332, %192, %380, %144, %416, %96 in 1 : vector<2x16xf32>, vector<2x16xf32>, vector<2x16xf32>, vector<2x16xf32>, vector<2x16xf32>, vector<2x16xf32>, vector<2x16xf32>, vector<2x16xf32>, vector<2x16xf32>, vector<2x16xf32>, vector<2x16xf32>, vector<2x16xf32>, vector<2x16xf32>, vector<2x16xf32>, vector<2x16xf32>, vector<2x16xf32> -> vector<2x256xf32>
    %c0_42 = arith.constant 0 : index
    %c0_43 = arith.constant 0 : index
    %422 = vector.load %arg5[%c0_42, %c0_43] : memref<2x256xf32, #tpu.memory_space<vmem>>, vector<2x256xf32>
    tpu.vector_store %arg5[%c0_42, %c0_43], %421 {strides = array<i32>} : memref<2x256xf32, #tpu.memory_space<vmem>>, vector<2x256xf32>,
    return
  }
}

</mosaic_0001>

<llo_original>
// kernel: lstm_encoder_pallas.1
$region0: #{lstm_encoder_pallas.1}
  #allocation0 [shape = 'u32[]', space=smem, size = 0x4, offset = 0x4, fixed_abs, tag = 'smem constant byte address 0x4 - core index']
  #allocation1 [shape = 'u32[144,128]{1,0:T(1,128)}', space=vmem, size = 0x12000, scoped, tag = 'internal scratch']
  %s0 = inlined_call_operand.vmem [shape: bf16[16,32], index: 0, kind: input, shape index: {}]
  %s1 = inlined_call_operand.vmem [shape: bf16[32,128], index: 1, kind: input, shape index: {}]
  %s2 = inlined_call_operand.vmem [shape: f32[1,128], index: 2, kind: input, shape index: {}]
  %s3 = inlined_call_operand.vmem [shape: bf16[32,128], index: 3, kind: input, shape index: {}]
  %s4 = inlined_call_operand.vmem [shape: s32[2,1], index: 4, kind: input, shape index: {}]
  %s5 = inlined_call_operand.vmem [shape: f32[2,256], index: 5, kind: output, shape index: {}]
  %s6 = sld [smem:[#allocation0]]
  $region30: #{lstm_encoder_pallas.1} parent=0
    _
  %s8 = ssub.s32 1, %s6
  %s9 = scalar_select 0, %s8, %s6
  // Predicated region
  $region2: #{lstm_encoder_pallas.1} parent=0 // pred_check
    _
  $region3: #{lstm_encoder_pallas.1} parent=0 // pred_check_branch
    %11 = sbr.rel (0) target = $region5
  $region4: #{lstm_encoder_pallas.1} parent=0 // pred_region
    _
  $region5: #{lstm_encoder_pallas.1} parent=0 // pred_fallthru
    _
  // Predicated region
  $region6: #{lstm_encoder_pallas.1} parent=0 // pred_check
    _
  $region7: #{lstm_encoder_pallas.1} parent=0 // pred_check_branch
    %13 = sbr.rel (0) target = $region9
  $region8: #{lstm_encoder_pallas.1} parent=0 // pred_region
    _
  $region9: #{lstm_encoder_pallas.1} parent=0 // pred_fallthru
    _
  // Predicated region
  $region10: #{lstm_encoder_pallas.1} parent=0 // pred_check
    _
  $region11: #{lstm_encoder_pallas.1} parent=0 // pred_check_branch
    %15 = sbr.rel (0) target = $region13
  $region12: #{lstm_encoder_pallas.1} parent=0 // pred_region
    _
  $region13: #{lstm_encoder_pallas.1} parent=0 // pred_fallthru
    _
  // Predicated region
  $region14: #{lstm_encoder_pallas.1} parent=0 // pred_check
    _
  $region15: #{lstm_encoder_pallas.1} parent=0 // pred_check_branch
    %17 = sbr.rel (0) target = $region17
  $region16: #{lstm_encoder_pallas.1} parent=0 // pred_region
    _
  $region17: #{lstm_encoder_pallas.1} parent=0 // pred_fallthru
    _
  // Predicated region
  $region18: #{lstm_encoder_pallas.1} parent=0 // pred_check
    _
  $region19: #{lstm_encoder_pallas.1} parent=0 // pred_check_branch
    %19 = sbr.rel (0) target = $region21
  $region20: #{lstm_encoder_pallas.1} parent=0 // pred_region
    _
  $region21: #{lstm_encoder_pallas.1} parent=0 // pred_fallthru
    _
  %v21 = vld [vmem:[%s0] sm:$0xf]
  %v22 = vld [vmem:[%s0 + $0x4] sm:$0xf]
  %v23 = vld [vmem:[%s1] sm:$0xf]
  %v24 = vld [vmem:[%s1 + $0x4] sm:$0xf]
  %v25 = vld [vmem:[%s1 + $0x8] sm:$0xf]
  %v26 = vld [vmem:[%s1 + $0xc] sm:$0xf]
  %v27 = vld [vmem:[%s2] sm:$0x1]
  %v29 = vlaneseq
  %v30 = vshrl.u32 %v29, 7
  %v31 = vsub.s32 0, %v30
  %v32 = vrot.slane %v27, %v31
  %v36 = vunpack.c.l.b16 %v21
  %v37 = vunpack.c.l.b16 %v22
  %v38 = vpack.c.b16 %v37, %v36
  %v43 = vunpack.c.l.b16 %v23
  %v44 = vunpack.c.l.b16 %v24
  %v45 = vunpack.c.l.b16 %v25
  %v46 = vunpack.c.l.b16 %v26
  %v47 = vpack.c.b16 %v44, %v43
  %v48 = vpack.c.b16 %v46, %v45
  %vm51 = vcmask 261120
  %v53 = vsel %vm51, %v38, 0
  %55 = vmatprep.subr.bf16.mxu0 0
  %56 = vmatpush1.bf16.msra.mxu0 0
  %57 = vmatprep.subr.bf16.mxu0 0
  %58 = vmatpush1.bf16.msra.mxu0 0
  %59 = vmatprep.subr.bf16.mxu0 0
  %60 = vmatpush1.bf16.msra.mxu0 0
  %61 = vmatprep.subr.bf16.mxu0 0
  %62 = vmatpush1.bf16.msra.mxu0 0
  %63 = vmatprep.subr.bf16.mxu0 0
  %64 = vmatpush1.bf16.msra.mxu0 0
  %65 = vmatprep.subr.bf16.mxu0 0
  %66 = vmatpush1.bf16.msra.mxu0 0
  %67 = vmatprep.subr.bf16.mxu0 0
  %68 = vmatpush1.bf16.msra.mxu0 %v48
  %69 = vmatprep.subr.bf16.mxu0 0
  %70 = vmatpush1.bf16.msra.mxu0 %v47
  %71 = vmatprep.subr.bf16.mxu0 0
  %72 = vmatpush2.bf16.msra.mxu0 0
  %73 = vmatprep.subr.bf16.mxu0 0
  %74 = vmatpush2.bf16.msra.mxu0 0
  %75 = vmatprep.subr.bf16.mxu0 0
  %76 = vmatpush2.bf16.msra.mxu0 0
  %77 = vmatprep.subr.bf16.mxu0 0
  %78 = vmatpush2.bf16.msra.mxu0 0
  %79 = vmatprep.subr.bf16.mxu0 0
  %80 = vmatpush2.bf16.msra.mxu0 0
  %81 = vmatprep.subr.bf16.mxu0 0
  %82 = vmatpush2.bf16.msra.mxu0 0
  %83 = vmatprep.subr.bf16.mxu0 0
  %84 = vmatpush2.bf16.msra.mxu0 0
  %85 = vmatprep.subr.bf16.mxu0 0
  %86 = vmatpush2.bf16.msra.mxu0 0
  %87 = vmatprep.mubr.bf16.mxu0 0
  %88 = vmatmul.mubr.bf16.gmra.mxu0 %v53
  %v89 = vpop.f32.mrf.mxu0
  %v90 = vadd.f32 %v32, %v89
  %v91 = vpop.f32.mrf.mxu0
  %v92 = vpop.f32.mrf.mxu0
  %v93 = vadd.f32 %v32, %v92
  %v94 = vpop.f32.mrf.mxu0
  %95 = vdwg.mxu0
  %v96 = vld [vmem:[%s3] sm:$0xf]
  %v97 = vld [vmem:[%s3 + $0x4] sm:$0xf]
  %v98 = vld [vmem:[%s3 + $0x8] sm:$0xf]
  %v99 = vld [vmem:[%s3 + $0xc] sm:$0xf]
  %v100 = vld [vmem:[%s4] sm:$0x3]
  %vm101 = vcmp.gt.s32.totalorder %v100, 0
  %vm102 = vcmp.gt.s32.totalorder %v100, 1
  %vm103 = vcmp.gt.s32.totalorder %v100, 2
  %vm104 = vcmp.gt.s32.totalorder %v100, 3
  %vm105 = vcmp.gt.s32.totalorder %v100, 4
  %vm106 = vcmp.gt.s32.totalorder %v100, 5
  %vm107 = vcmp.gt.s32.totalorder %v100, 6
  %vm108 = vcmp.gt.s32.totalorder %v100, 7
  %v110 = vrot.slane %v93, 6
  %vm112 = vcmask 523264
  %v113 = vsel %vm112, %v90, %v110
  %v114 = vrot.slane %v93, 2
  %v116 = vsel %vm112, %v90, %v114
  %v118 = vrot.slane %v90, 6
  %v120 = vsel %vm112, %v93, %v118
  %v121 = vrot.slane %v90, 2
  %v123 = vsel %vm112, %v93, %v121
  %v124 = vpack.c.bf16 0.0, 0.0
  %v129 = vunpack.c.l.b16 %v96
  %v130 = vunpack.c.l.b16 %v97
  %v131 = vunpack.c.l.b16 %v98
  %v132 = vunpack.c.l.b16 %v99
  %v133 = vpack.c.b16 %v130, %v129
  %v134 = vpack.c.b16 %v132, %v131
  %v138 = vsel %vm51, %v124, 0
  %140 = vmatprep.subr.bf16.mxu0 0
  %141 = vmatpush1.bf16.msra.mxu0 0
  %142 = vmatprep.subr.bf16.mxu0 0
  %143 = vmatpush1.bf16.msra.mxu0 0
  %144 = vmatprep.subr.bf16.mxu0 0
  %145 = vmatpush1.bf16.msra.mxu0 0
  %146 = vmatprep.subr.bf16.mxu0 0
  %147 = vmatpush1.bf16.msra.mxu0 0
  %148 = vmatprep.subr.bf16.mxu0 0
  %149 = vmatpush1.bf16.msra.mxu0 0
  %150 = vmatprep.subr.bf16.mxu0 0
  %151 = vmatpush1.bf16.msra.mxu0 0
  %152 = vmatprep.subr.bf16.mxu0 0
  %153 = vmatpush1.bf16.msra.mxu0 %v134
  %154 = vmatprep.subr.bf16.mxu0 0
  %155 = vmatpush1.bf16.msra.mxu0 %v133
  %156 = vmatprep.subr.bf16.mxu0 0
  %157 = vmatpush2.bf16.msra.mxu0 0
  %158 = vmatprep.subr.bf16.mxu0 0
  %159 = vmatpush2.bf16.msra.mxu0 0
  %160 = vmatprep.subr.bf16.mxu0 0
  %161 = vmatpush2.bf16.msra.mxu0 0
  %162 = vmatprep.subr.bf16.mxu0 0
  %163 = vmatpush2.bf16.msra.mxu0 0
  %164 = vmatprep.subr.bf16.mxu0 0
  %165 = vmatpush2.bf16.msra.mxu0 0
  %166 = vmatprep.subr.bf16.mxu0 0
  %167 = vmatpush2.bf16.msra.mxu0 0
  %168 = vmatprep.subr.bf16.mxu0 0
  %169 = vmatpush2.bf16.msra.mxu0 0
  %170 = vmatprep.subr.bf16.mxu0 0
  %171 = vmatpush2.bf16.msra.mxu0 0
  %172 = vmatprep.mubr.bf16.mxu0 0
  %173 = vmatmul.mubr.bf16.gmra.mxu0 %v138
  %v174 = vpop.f32.mrf.mxu0
  %v175 = vadd.f32 0.0, %v174
  %v176 = vpop.f32.mrf.mxu0
  %v177 = vpop.f32.mrf.mxu0
  %v178 = vpop.f32.mrf.mxu0
  %179 = vdwg.mxu0
  %v180 = vadd.f32 %v113, %v175
  %v181 = vxor.u32 %v180, 2147483648
  %v182 = vmul.f32 %v181, 1.442695
  %v183 = vpow.pop %v182
  %v184 = vadd.f32 %v183, 1.0
  %v185 = vrcp.pop %v184
  %v186 = vmul.f32 1.0, %v185
  %v187 = vtanh.pop %v180
  %v188 = vmul.f32 %v186, 0.0
  %190 = vrot.lane.b32.xlu0 %v187, 96
  %v191 = vpop.permute.xlu0 %190
  %v193 = vmul.f32 %v186, %v191
  %195 = vrot.lane.b32.xlu0 %v193, 16
  %v196 = vpop.permute.xlu0 %195
  %v198 = vadd.f32 %v188, %v196
  %v199 = vtanh.pop %v198
  %201 = vrot.lane.b32.xlu0 %v199, 32
  %v202 = vpop.permute.xlu0 %201
  %v204 = vmul.f32 %v186, %v202
  %v205 = vsel %vm101, 1, 0
  %206 = vset.pattern.permute.xlu0 0
  %207 = vperm.xlu0 %206, %v205
  %v208 = vpop.permute.xlu0 %207
  %vm209 = vcmp.eq.s32.totalorder %v208, 1
  %v210 = vsel %vm209, %v204, 0.0
  %v211 = vsel %vm209, %v198, 0.0
  %v212 = vsel %vm108, 1, 0
  %213 = vset.pattern.permute.xlu0 0
  %214 = vperm.xlu0 %213, %v212
  %v215 = vpop.permute.xlu0 %214
  %vm216 = vcmp.eq.s32.totalorder %v215, 1
  %v217 = vsel %vm216, %v204, 0.0
  %v218 = vsel %vm216, %v198, 0.0
  %220 = vrot.lane.b32.xlu0 %v210, 80
  %v221 = vpop.permute.xlu0 %220
  %224 = vrot.lane.b32.xlu0 %v217, 32
  %v225 = vpop.permute.xlu0 %224
  %vm227 = vcmask 130048
  %v228 = vsel %vm227, %v221, %v225
  %v229 = vpack.c.bf16 %v228, %v228
  %v231 = vsel %vm51, %v229, 0
  %233 = vmatprep.subr.bf16.mxu0 0
  %234 = vmatpush1.bf16.msra.mxu0 0
  %235 = vmatprep.subr.bf16.mxu0 0
  %236 = vmatpush1.bf16.msra.mxu0 0
  %237 = vmatprep.subr.bf16.mxu0 0
  %238 = vmatpush1.bf16.msra.mxu0 0
  %239 = vmatprep.subr.bf16.mxu0 0
  %240 = vmatpush1.bf16.msra.mxu0 0
  %241 = vmatprep.subr.bf16.mxu0 0
  %242 = vmatpush1.bf16.msra.mxu0 0
  %243 = vmatprep.subr.bf16.mxu0 0
  %244 = vmatpush1.bf16.msra.mxu0 0
  %245 = vmatprep.subr.bf16.mxu0 0
  %246 = vmatpush1.bf16.msra.mxu0 %v134
  %247 = vmatprep.subr.bf16.mxu0 0
  %248 = vmatpush1.bf16.msra.mxu0 %v133
  %249 = vmatprep.subr.bf16.mxu0 0
  %250 = vmatpush2.bf16.msra.mxu0 0
  %251 = vmatprep.subr.bf16.mxu0 0
  %252 = vmatpush2.bf16.msra.mxu0 0
  %253 = vmatprep.subr.bf16.mxu0 0
  %254 = vmatpush2.bf16.msra.mxu0 0
  %255 = vmatprep.subr.bf16.mxu0 0
  %256 = vmatpush2.bf16.msra.mxu0 0
  %257 = vmatprep.subr.bf16.mxu0 0
  %258 = vmatpush2.bf16.msra.mxu0 0
  %259 = vmatprep.subr.bf16.mxu0 0
  %260 = vmatpush2.bf16.msra.mxu0 0
  %261 = vmatprep.subr.bf16.mxu0 0
  %262 = vmatpush2.bf16.msra.mxu0 0
  %263 = vmatprep.subr.bf16.mxu0 0
  %264 = vmatpush2.bf16.msra.mxu0 0
  %265 = vmatprep.mubr.bf16.mxu0 0
  %266 = vmatmul.mubr.bf16.gmra.mxu0 %v231
  %v267 = vpop.f32.mrf.mxu0
  %v268 = vadd.f32 0.0, %v267
  %v269 = vpop.f32.mrf.mxu0
  %v270 = vpop.f32.mrf.mxu0
  %v271 = vpop.f32.mrf.mxu0
  %272 = vdwg.mxu0
  %v274 = vrot.slane %v268, 6
  %v276 = vadd.f32 %v116, %v274
  %v277 = vxor.u32 %v276, 2147483648
  %v278 = vmul.f32 %v277, 1.442695
  %v279 = vpow.pop %v278
  %v280 = vadd.f32 %v279, 1.0
  %v281 = vrcp.pop %v280
  %v282 = vmul.f32 1.0, %v281
  %v283 = vtanh.pop %v276
  %v285 = vrot.slane %v211, 6
  %v287 = vmul.f32 %v282, %v285
  %289 = vrot.lane.b32.xlu0 %v283, 96
  %v290 = vpop.permute.xlu0 %289
  %v292 = vmul.f32 %v282, %v290
  %294 = vrot.lane.b32.xlu0 %v292, 16
  %v295 = vpop.permute.xlu0 %294
  %v297 = vadd.f32 %v287, %v295
  %v298 = vtanh.pop %v297
  %300 = vrot.lane.b32.xlu0 %v298, 32
  %v301 = vpop.permute.xlu0 %300
  %v303 = vmul.f32 %v282, %v301
  %v305 = vrot.slane %v218, 6
  %v307 = vmul.f32 %v282, %v305
  %v308 = vadd.f32 %v307, %v295
  %v309 = vtanh.pop %v308
  %311 = vrot.lane.b32.xlu0 %v309, 32
  %v312 = vpop.permute.xlu0 %311
  %v314 = vmul.f32 %v282, %v312
  %v315 = vsel %vm102, 1, 0
  %316 = vset.pattern.permute.xlu0 0
  %317 = vperm.xlu0 %316, %v315
  %v318 = vpop.permute.xlu0 %317
  %vm319 = vcmp.eq.s32.totalorder %v318, 1
  %v321 = vrot.slane %v303, 2
  %322 = vrot.lane.b32.xlu0 %v321, 80
  %v323 = vpop.permute.xlu0 %322
  %v325 = vsel %vm319, %v323, %v221
  %v327 = vrot.slane %v297, 2
  %328 = vrot.lane.b32.xlu0 %v327, 112
  %v329 = vpop.permute.xlu0 %328
  %331 = vrot.lane.b32.xlu0 %v211, 112
  %v332 = vpop.permute.xlu0 %331
  %v334 = vsel %vm319, %v329, %v332
  %v335 = vsel %vm107, 1, 0
  %336 = vset.pattern.permute.xlu0 0
  %337 = vperm.xlu0 %336, %v335
  %v338 = vpop.permute.xlu0 %337
  %vm339 = vcmp.eq.s32.totalorder %v338, 1
  %v341 = vrot.slane %v314, 2
  %342 = vrot.lane.b32.xlu0 %v341, 16
  %v343 = vpop.permute.xlu0 %342
  %345 = vrot.lane.b32.xlu0 %v217, 16
  %v346 = vpop.permute.xlu0 %345
  %v348 = vsel %vm339, %v343, %v346
  %v350 = vrot.slane %v308, 2
  %351 = vrot.lane.b32.xlu0 %v350, 48
  %v352 = vpop.permute.xlu0 %351
  %354 = vrot.lane.b32.xlu0 %v218, 48
  %v355 = vpop.permute.xlu0 %354
  %v357 = vsel %vm339, %v352, %v355
  %v358 = vsel %vm319, %v323, 0.0
  %v359 = vsel %vm339, %v343, 0.0
  %361 = vrot.lane.b32.xlu0 %v348, 16
  %v362 = vpop.permute.xlu0 %361
  %v364 = vsel %vm227, %v325, %v362
  %v365 = vpack.c.bf16 %v364, %v364
  %v367 = vsel %vm51, %v365, 0
  %369 = vmatprep.subr.bf16.mxu0 0
  %370 = vmatpush1.bf16.msra.mxu0 0
  %371 = vmatprep.subr.bf16.mxu0 0
  %372 = vmatpush1.bf16.msra.mxu0 0
  %373 = vmatprep.subr.bf16.mxu0 0
  %374 = vmatpush1.bf16.msra.mxu0 0
  %375 = vmatprep.subr.bf16.mxu0 0
  %376 = vmatpush1.bf16.msra.mxu0 0
  %377 = vmatprep.subr.bf16.mxu0 0
  %378 = vmatpush1.bf16.msra.mxu0 0
  %379 = vmatprep.subr.bf16.mxu0 0
  %380 = vmatpush1.bf16.msra.mxu0 0
  %381 = vmatprep.subr.bf16.mxu0 0
  %382 = vmatpush1.bf16.msra.mxu0 %v134
  %383 = vmatprep.subr.bf16.mxu0 0
  %384 = vmatpush1.bf16.msra.mxu0 %v133
  %385 = vmatprep.subr.bf16.mxu0 0
  %386 = vmatpush2.bf16.msra.mxu0 0
  %387 = vmatprep.subr.bf16.mxu0 0
  %388 = vmatpush2.bf16.msra.mxu0 0
  %389 = vmatprep.subr.bf16.mxu0 0
  %390 = vmatpush2.bf16.msra.mxu0 0
  %391 = vmatprep.subr.bf16.mxu0 0
  %392 = vmatpush2.bf16.msra.mxu0 0
  %393 = vmatprep.subr.bf16.mxu0 0
  %394 = vmatpush2.bf16.msra.mxu0 0
  %395 = vmatprep.subr.bf16.mxu0 0
  %396 = vmatpush2.bf16.msra.mxu0 0
  %397 = vmatprep.subr.bf16.mxu0 0
  %398 = vmatpush2.bf16.msra.mxu0 0
  %399 = vmatprep.subr.bf16.mxu0 0
  %400 = vmatpush2.bf16.msra.mxu0 0
  %401 = vmatprep.mubr.bf16.mxu0 0
  %402 = vmatmul.mubr.bf16.gmra.mxu0 %v367
  %v403 = vpop.f32.mrf.mxu0
  %v404 = vadd.f32 0.0, %v403
  %v405 = vpop.f32.mrf.mxu0
  %v406 = vpop.f32.mrf.mxu0
  %v407 = vpop.f32.mrf.mxu0
  %408 = vdwg.mxu0
  %v410 = vrot.slane %v404, 4
  %v412 = vadd.f32 %v113, %v410
  %v413 = vxor.u32 %v412, 2147483648
  %v414 = vmul.f32 %v413, 1.442695
  %v415 = vpow.pop %v414
  %v416 = vadd.f32 %v415, 1.0
  %v417 = vrcp.pop %v416
  %v418 = vmul.f32 1.0, %v417
  %v419 = vtanh.pop %v412
  %v421 = vrot.slane %v334, 4
  %422 = vrot.lane.b32.xlu0 %v421, 16
  %v423 = vpop.permute.xlu0 %422
  %v425 = vmul.f32 %v418, %v423
  %427 = vrot.lane.b32.xlu0 %v419, 96
  %v428 = vpop.permute.xlu0 %427
  %v430 = vmul.f32 %v418, %v428
  %432 = vrot.lane.b32.xlu0 %v430, 16
  %v433 = vpop.permute.xlu0 %432
  %v435 = vadd.f32 %v425, %v433
  %v436 = vtanh.pop %v435
  %438 = vrot.lane.b32.xlu0 %v436, 32
  %v439 = vpop.permute.xlu0 %438
  %v441 = vmul.f32 %v418, %v439
  %v443 = vrot.slane %v357, 4
  %444 = vrot.lane.b32.xlu0 %v443, 80
  %v445 = vpop.permute.xlu0 %444
  %v447 = vmul.f32 %v418, %v445
  %v448 = vadd.f32 %v447, %v433
  %v449 = vtanh.pop %v448
  %451 = vrot.lane.b32.xlu0 %v449, 32
  %v452 = vpop.permute.xlu0 %451
  %v454 = vmul.f32 %v418, %v452
  %v455 = vsel %vm103, 1, 0
  %456 = vset.pattern.permute.xlu0 0
  %457 = vperm.xlu0 %456, %v455
  %v458 = vpop.permute.xlu0 %457
  %vm459 = vcmp.eq.s32.totalorder %v458, 1
  %v461 = vrot.slane %v441, 4
  %462 = vrot.lane.b32.xlu0 %v461, 80
  %v463 = vpop.permute.xlu0 %462
  %v465 = vsel %vm459, %v463, %v325
  %v467 = vrot.slane %v435, 4
  %468 = vrot.lane.b32.xlu0 %v467, 112
  %v469 = vpop.permute.xlu0 %468
  %v471 = vsel %vm459, %v469, %v334
  %v472 = vsel %vm106, 1, 0
  %473 = vset.pattern.permute.xlu0 0
  %474 = vperm.xlu0 %473, %v472
  %v475 = vpop.permute.xlu0 %474
  %vm476 = vcmp.eq.s32.totalorder %v475, 1
  %v478 = vrot.slane %v454, 4
  %479 = vrot.lane.b32.xlu0 %v478, 16
  %v480 = vpop.permute.xlu0 %479
  %v482 = vsel %vm476, %v480, %v348
  %v484 = vrot.slane %v448, 4
  %485 = vrot.lane.b32.xlu0 %v484, 48
  %v486 = vpop.permute.xlu0 %485
  %v488 = vsel %vm476, %v486, %v357
  %v489 = vsel %vm459, %v463, 0.0
  %v490 = vsel %vm476, %v480, 0.0
  %492 = vrot.lane.b32.xlu0 %v482, 16
  %v493 = vpop.permute.xlu0 %492
  %v495 = vsel %vm227, %v465, %v493
  %v496 = vpack.c.bf16 %v495, %v495
  %v498 = vsel %vm51, %v496, 0
  %500 = vmatprep.subr.bf16.mxu0 0
  %501 = vmatpush1.bf16.msra.mxu0 0
  %502 = vmatprep.subr.bf16.mxu0 0
  %503 = vmatpush1.bf16.msra.mxu0 0
  %504 = vmatprep.subr.bf16.mxu0 0
  %505 = vmatpush1.bf16.msra.mxu0 0
  %506 = vmatprep.subr.bf16.mxu0 0
  %507 = vmatpush1.bf16.msra.mxu0 0
  %508 = vmatprep.subr.bf16.mxu0 0
  %509 = vmatpush1.bf16.msra.mxu0 0
  %510 = vmatprep.subr.bf16.mxu0 0
  %511 = vmatpush1.bf16.msra.mxu0 0
  %512 = vmatprep.subr.bf16.mxu0 0
  %513 = vmatpush1.bf16.msra.mxu0 %v134
  %514 = vmatprep.subr.bf16.mxu0 0
  %515 = vmatpush1.bf16.msra.mxu0 %v133
  %516 = vmatprep.subr.bf16.mxu0 0
  %517 = vmatpush2.bf16.msra.mxu0 0
  %518 = vmatprep.subr.bf16.mxu0 0
  %519 = vmatpush2.bf16.msra.mxu0 0
  %520 = vmatprep.subr.bf16.mxu0 0
  %521 = vmatpush2.bf16.msra.mxu0 0
  %522 = vmatprep.subr.bf16.mxu0 0
  %523 = vmatpush2.bf16.msra.mxu0 0
  %524 = vmatprep.subr.bf16.mxu0 0
  %525 = vmatpush2.bf16.msra.mxu0 0
  %526 = vmatprep.subr.bf16.mxu0 0
  %527 = vmatpush2.bf16.msra.mxu0 0
  %528 = vmatprep.subr.bf16.mxu0 0
  %529 = vmatpush2.bf16.msra.mxu0 0
  %530 = vmatprep.subr.bf16.mxu0 0
  %531 = vmatpush2.bf16.msra.mxu0 0
  %532 = vmatprep.mubr.bf16.mxu0 0
  %533 = vmatmul.mubr.bf16.gmra.mxu0 %v498
  %v534 = vpop.f32.mrf.mxu0
  %v535 = vadd.f32 0.0, %v534
  %v536 = vpop.f32.mrf.mxu0
  %v537 = vpop.f32.mrf.mxu0
  %v538 = vpop.f32.mrf.mxu0
  %539 = vdwg.mxu0
  %v541 = vrot.slane %v535, 2
  %v543 = vadd.f32 %v116, %v541
  %v544 = vxor.u32 %v543, 2147483648
  %v545 = vmul.f32 %v544, 1.442695
  %v546 = vpow.pop %v545
  %v547 = vadd.f32 %v546, 1.0
  %v548 = vrcp.pop %v547
  %v549 = vmul.f32 1.0, %v548
  %v550 = vtanh.pop %v543
  %v552 = vrot.slane %v471, 2
  %553 = vrot.lane.b32.xlu0 %v552, 16
  %v554 = vpop.permute.xlu0 %553
  %v556 = vmul.f32 %v549, %v554
  %558 = vrot.lane.b32.xlu0 %v550, 96
  %v559 = vpop.permute.xlu0 %558
  %v561 = vmul.f32 %v549, %v559
  %563 = vrot.lane.b32.xlu0 %v561, 16
  %v564 = vpop.permute.xlu0 %563
  %v566 = vadd.f32 %v556, %v564
  %v567 = vtanh.pop %v566
  %569 = vrot.lane.b32.xlu0 %v567, 32
  %v570 = vpop.permute.xlu0 %569
  %v572 = vmul.f32 %v549, %v570
  %v574 = vrot.slane %v488, 2
  %575 = vrot.lane.b32.xlu0 %v574, 80
  %v576 = vpop.permute.xlu0 %575
  %v578 = vmul.f32 %v549, %v576
  %v579 = vadd.f32 %v578, %v564
  %v580 = vtanh.pop %v579
  %582 = vrot.lane.b32.xlu0 %v580, 32
  %v583 = vpop.permute.xlu0 %582
  %v585 = vmul.f32 %v549, %v583
  %v586 = vsel %vm104, 1, 0
  %587 = vset.pattern.permute.xlu0 0
  %588 = vperm.xlu0 %587, %v586
  %v589 = vpop.permute.xlu0 %588
  %vm590 = vcmp.eq.s32.totalorder %v589, 1
  %v592 = vrot.slane %v572, 6
  %593 = vrot.lane.b32.xlu0 %v592, 80
  %v594 = vpop.permute.xlu0 %593
  %v596 = vsel %vm590, %v594, %v465
  %v598 = vrot.slane %v566, 6
  %599 = vrot.lane.b32.xlu0 %v598, 112
  %v600 = vpop.permute.xlu0 %599
  %v602 = vsel %vm590, %v600, %v471
  %v603 = vsel %vm105, 1, 0
  %604 = vset.pattern.permute.xlu0 0
  %605 = vperm.xlu0 %604, %v603
  %v606 = vpop.permute.xlu0 %605
  %vm607 = vcmp.eq.s32.totalorder %v606, 1
  %v609 = vrot.slane %v585, 6
  %610 = vrot.lane.b32.xlu0 %v609, 16
  %v611 = vpop.permute.xlu0 %610
  %v613 = vsel %vm607, %v611, %v482
  %v615 = vrot.slane %v579, 6
  %616 = vrot.lane.b32.xlu0 %v615, 48
  %v617 = vpop.permute.xlu0 %616
  %v619 = vsel %vm607, %v617, %v488
  %v620 = vsel %vm590, %v594, 0.0
  %v621 = vsel %vm607, %v611, 0.0
  %623 = vrot.lane.b32.xlu0 %v613, 16
  %v624 = vpop.permute.xlu0 %623
  %v626 = vsel %vm227, %v596, %v624
  %v627 = vpack.c.bf16 %v626, %v626
  %v629 = vsel %vm51, %v627, 0
  %631 = vmatprep.subr.bf16.mxu0 0
  %632 = vmatpush1.bf16.msra.mxu0 0
  %633 = vmatprep.subr.bf16.mxu0 0
  %634 = vmatpush1.bf16.msra.mxu0 0
  %635 = vmatprep.subr.bf16.mxu0 0
  %636 = vmatpush1.bf16.msra.mxu0 0
  %637 = vmatprep.subr.bf16.mxu0 0
  %638 = vmatpush1.bf16.msra.mxu0 0
  %639 = vmatprep.subr.bf16.mxu0 0
  %640 = vmatpush1.bf16.msra.mxu0 0
  %641 = vmatprep.subr.bf16.mxu0 0
  %642 = vmatpush1.bf16.msra.mxu0 0
  %643 = vmatprep.subr.bf16.mxu0 0
  %644 = vmatpush1.bf16.msra.mxu0 %v134
  %645 = vmatprep.subr.bf16.mxu0 0
  %646 = vmatpush1.bf16.msra.mxu0 %v133
  %647 = vmatprep.subr.bf16.mxu0 0
  %648 = vmatpush2.bf16.msra.mxu0 0
  %649 = vmatprep.subr.bf16.mxu0 0
  %650 = vmatpush2.bf16.msra.mxu0 0
  %651 = vmatprep.subr.bf16.mxu0 0
  %652 = vmatpush2.bf16.msra.mxu0 0
  %653 = vmatprep.subr.bf16.mxu0 0
  %654 = vmatpush2.bf16.msra.mxu0 0
  %655 = vmatprep.subr.bf16.mxu0 0
  %656 = vmatpush2.bf16.msra.mxu0 0
  %657 = vmatprep.subr.bf16.mxu0 0
  %658 = vmatpush2.bf16.msra.mxu0 0
  %659 = vmatprep.subr.bf16.mxu0 0
  %660 = vmatpush2.bf16.msra.mxu0 0
  %661 = vmatprep.subr.bf16.mxu0 0
  %662 = vmatpush2.bf16.msra.mxu0 0
  %663 = vmatprep.mubr.bf16.mxu0 0
  %664 = vmatmul.mubr.bf16.gmra.mxu0 %v629
  %v665 = vpop.f32.mrf.mxu0
  %v666 = vadd.f32 0.0, %v665
  %v667 = vpop.f32.mrf.mxu0
  %v668 = vpop.f32.mrf.mxu0
  %v669 = vpop.f32.mrf.mxu0
  %670 = vdwg.mxu0
  %v671 = vadd.f32 %v120, %v666
  %v672 = vxor.u32 %v671, 2147483648
  %v673 = vmul.f32 %v672, 1.442695
  %v674 = vpow.pop %v673
  %v675 = vadd.f32 %v674, 1.0
  %v676 = vrcp.pop %v675
  %v677 = vmul.f32 1.0, %v676
  %v678 = vtanh.pop %v671
  %680 = vrot.lane.b32.xlu0 %v602, 16
  %v681 = vpop.permute.xlu0 %680
  %v683 = vmul.f32 %v677, %v681
  %685 = vrot.lane.b32.xlu0 %v678, 96
  %v686 = vpop.permute.xlu0 %685
  %v688 = vmul.f32 %v677, %v686
  %690 = vrot.lane.b32.xlu0 %v688, 16
  %v691 = vpop.permute.xlu0 %690
  %v693 = vadd.f32 %v683, %v691
  %v694 = vtanh.pop %v693
  %696 = vrot.lane.b32.xlu0 %v694, 32
  %v697 = vpop.permute.xlu0 %696
  %v699 = vmul.f32 %v677, %v697
  %701 = vrot.lane.b32.xlu0 %v619, 80
  %v702 = vpop.permute.xlu0 %701
  %v704 = vmul.f32 %v677, %v702
  %v705 = vadd.f32 %v704, %v691
  %v706 = vtanh.pop %v705
  %708 = vrot.lane.b32.xlu0 %v706, 32
  %v709 = vpop.permute.xlu0 %708
  %v711 = vmul.f32 %v677, %v709
  %713 = vrot.lane.b32.xlu0 %v596, 48
  %v714 = vpop.permute.xlu0 %713
  %v716 = vsel %vm607, %v699, %v714
  %v717 = vsel %vm607, %v693, %v681
  %718 = vrot.lane.b32.xlu0 %v613, 112
  %v719 = vpop.permute.xlu0 %718
  %v721 = vsel %vm590, %v711, %v719
  %v722 = vsel %vm590, %v705, %v702
  %v723 = vsel %vm607, %v699, 0.0
  %v724 = vsel %vm590, %v711, 0.0
  %726 = vrot.lane.b32.xlu0 %v716, 80
  %v727 = vpop.permute.xlu0 %726
  %730 = vrot.lane.b32.xlu0 %v721, 32
  %v731 = vpop.permute.xlu0 %730
  %v733 = vsel %vm227, %v727, %v731
  %v734 = vpack.c.bf16 %v733, %v733
  %v736 = vsel %vm51, %v734, 0
  %738 = vmatprep.subr.bf16.mxu0 0
  %739 = vmatpush1.bf16.msra.mxu0 0
  %740 = vmatprep.subr.bf16.mxu0 0
  %741 = vmatpush1.bf16.msra.mxu0 0
  %742 = vmatprep.subr.bf16.mxu0 0
  %743 = vmatpush1.bf16.msra.mxu0 0
  %744 = vmatprep.subr.bf16.mxu0 0
  %745 = vmatpush1.bf16.msra.mxu0 0
  %746 = vmatprep.subr.bf16.mxu0 0
  %747 = vmatpush1.bf16.msra.mxu0 0
  %748 = vmatprep.subr.bf16.mxu0 0
  %749 = vmatpush1.bf16.msra.mxu0 0
  %750 = vmatprep.subr.bf16.mxu0 0
  %751 = vmatpush1.bf16.msra.mxu0 %v134
  %752 = vmatprep.subr.bf16.mxu0 0
  %753 = vmatpush1.bf16.msra.mxu0 %v133
  %754 = vmatprep.subr.bf16.mxu0 0
  %755 = vmatpush2.bf16.msra.mxu0 0
  %756 = vmatprep.subr.bf16.mxu0 0
  %757 = vmatpush2.bf16.msra.mxu0 0
  %758 = vmatprep.subr.bf16.mxu0 0
  %759 = vmatpush2.bf16.msra.mxu0 0
  %760 = vmatprep.subr.bf16.mxu0 0
  %761 = vmatpush2.bf16.msra.mxu0 0
  %762 = vmatprep.subr.bf16.mxu0 0
  %763 = vmatpush2.bf16.msra.mxu0 0
  %764 = vmatprep.subr.bf16.mxu0 0
  %765 = vmatpush2.bf16.msra.mxu0 0
  %766 = vmatprep.subr.bf16.mxu0 0
  %767 = vmatpush2.bf16.msra.mxu0 0
  %768 = vmatprep.subr.bf16.mxu0 0
  %769 = vmatpush2.bf16.msra.mxu0 0
  %770 = vmatprep.mubr.bf16.mxu0 0
  %771 = vmatmul.mubr.bf16.gmra.mxu0 %v736
  %v772 = vpop.f32.mrf.mxu0
  %v773 = vadd.f32 0.0, %v772
  %v774 = vpop.f32.mrf.mxu0
  %v775 = vpop.f32.mrf.mxu0
  %v776 = vpop.f32.mrf.mxu0
  %777 = vdwg.mxu0
  %v779 = vrot.slane %v773, 6
  %v781 = vadd.f32 %v123, %v779
  %v782 = vxor.u32 %v781, 2147483648
  %v783 = vmul.f32 %v782, 1.442695
  %v784 = vpow.pop %v783
  %v785 = vadd.f32 %v784, 1.0
  %v786 = vrcp.pop %v785
  %v787 = vmul.f32 1.0, %v786
  %v788 = vtanh.pop %v781
  %v790 = vrot.slane %v717, 6
  %v792 = vmul.f32 %v787, %v790
  %794 = vrot.lane.b32.xlu0 %v788, 96
  %v795 = vpop.permute.xlu0 %794
  %v797 = vmul.f32 %v787, %v795
  %799 = vrot.lane.b32.xlu0 %v797, 16
  %v800 = vpop.permute.xlu0 %799
  %v802 = vadd.f32 %v792, %v800
  %v803 = vtanh.pop %v802
  %805 = vrot.lane.b32.xlu0 %v803, 32
  %v806 = vpop.permute.xlu0 %805
  %v808 = vmul.f32 %v787, %v806
  %v810 = vrot.slane %v722, 6
  %v812 = vmul.f32 %v787, %v810
  %v813 = vadd.f32 %v812, %v800
  %v814 = vtanh.pop %v813
  %816 = vrot.lane.b32.xlu0 %v814, 32
  %v817 = vpop.permute.xlu0 %816
  %v819 = vmul.f32 %v787, %v817
  %v821 = vrot.slane %v808, 2
  %822 = vrot.lane.b32.xlu0 %v821, 80
  %v823 = vpop.permute.xlu0 %822
  %v825 = vsel %vm476, %v823, %v727
  %v827 = vrot.slane %v802, 2
  %828 = vrot.lane.b32.xlu0 %v827, 112
  %v829 = vpop.permute.xlu0 %828
  %831 = vrot.lane.b32.xlu0 %v717, 112
  %v832 = vpop.permute.xlu0 %831
  %v834 = vsel %vm476, %v829, %v832
  %v836 = vrot.slane %v819, 2
  %837 = vrot.lane.b32.xlu0 %v836, 16
  %v838 = vpop.permute.xlu0 %837
  %840 = vrot.lane.b32.xlu0 %v721, 16
  %v841 = vpop.permute.xlu0 %840
  %v843 = vsel %vm459, %v838, %v841
  %v845 = vrot.slane %v813, 2
  %846 = vrot.lane.b32.xlu0 %v845, 48
  %v847 = vpop.permute.xlu0 %846
  %849 = vrot.lane.b32.xlu0 %v722, 48
  %v850 = vpop.permute.xlu0 %849
  %v852 = vsel %vm459, %v847, %v850
  %v853 = vsel %vm476, %v823, 0.0
  %v854 = vsel %vm459, %v838, 0.0
  %856 = vrot.lane.b32.xlu0 %v843, 16
  %v857 = vpop.permute.xlu0 %856
  %v859 = vsel %vm227, %v825, %v857
  %v860 = vpack.c.bf16 %v859, %v859
  %v862 = vsel %vm51, %v860, 0
  %864 = vmatprep.subr.bf16.mxu0 0
  %865 = vmatpush1.bf16.msra.mxu0 0
  %866 = vmatprep.subr.bf16.mxu0 0
  %867 = vmatpush1.bf16.msra.mxu0 0
  %868 = vmatprep.subr.bf16.mxu0 0
  %869 = vmatpush1.bf16.msra.mxu0 0
  %870 = vmatprep.subr.bf16.mxu0 0
  %871 = vmatpush1.bf16.msra.mxu0 0
  %872 = vmatprep.subr.bf16.mxu0 0
  %873 = vmatpush1.bf16.msra.mxu0 0
  %874 = vmatprep.subr.bf16.mxu0 0
  %875 = vmatpush1.bf16.msra.mxu0 0
  %876 = vmatprep.subr.bf16.mxu0 0
  %877 = vmatpush1.bf16.msra.mxu0 %v134
  %878 = vmatprep.subr.bf16.mxu0 0
  %879 = vmatpush1.bf16.msra.mxu0 %v133
  %880 = vmatprep.subr.bf16.mxu0 0
  %881 = vmatpush2.bf16.msra.mxu0 0
  %882 = vmatprep.subr.bf16.mxu0 0
  %883 = vmatpush2.bf16.msra.mxu0 0
  %884 = vmatprep.subr.bf16.mxu0 0
  %885 = vmatpush2.bf16.msra.mxu0 0
  %886 = vmatprep.subr.bf16.mxu0 0
  %887 = vmatpush2.bf16.msra.mxu0 0
  %888 = vmatprep.subr.bf16.mxu0 0
  %889 = vmatpush2.bf16.msra.mxu0 0
  %890 = vmatprep.subr.bf16.mxu0 0
  %891 = vmatpush2.bf16.msra.mxu0 0
  %892 = vmatprep.subr.bf16.mxu0 0
  %893 = vmatpush2.bf16.msra.mxu0 0
  %894 = vmatprep.subr.bf16.mxu0 0
  %895 = vmatpush2.bf16.msra.mxu0 0
  %896 = vmatprep.mubr.bf16.mxu0 0
  %897 = vmatmul.mubr.bf16.gmra.mxu0 %v862
  %v898 = vpop.f32.mrf.mxu0
  %v899 = vadd.f32 0.0, %v898
  %v900 = vpop.f32.mrf.mxu0
  %v901 = vpop.f32.mrf.mxu0
  %v902 = vpop.f32.mrf.mxu0
  %903 = vdwg.mxu0
  %v905 = vrot.slane %v899, 4
  %v907 = vadd.f32 %v120, %v905
  %v908 = vxor.u32 %v907, 2147483648
  %v909 = vmul.f32 %v908, 1.442695
  %v910 = vpow.pop %v909
  %v911 = vadd.f32 %v910, 1.0
  %v912 = vrcp.pop %v911
  %v913 = vmul.f32 1.0, %v912
  %v914 = vtanh.pop %v907
  %v916 = vrot.slane %v834, 4
  %917 = vrot.lane.b32.xlu0 %v916, 16
  %v918 = vpop.permute.xlu0 %917
  %v920 = vmul.f32 %v913, %v918
  %922 = vrot.lane.b32.xlu0 %v914, 96
  %v923 = vpop.permute.xlu0 %922
  %v925 = vmul.f32 %v913, %v923
  %927 = vrot.lane.b32.xlu0 %v925, 16
  %v928 = vpop.permute.xlu0 %927
  %v930 = vadd.f32 %v920, %v928
  %v931 = vtanh.pop %v930
  %933 = vrot.lane.b32.xlu0 %v931, 32
  %v934 = vpop.permute.xlu0 %933
  %v936 = vmul.f32 %v913, %v934
  %v938 = vrot.slane %v852, 4
  %939 = vrot.lane.b32.xlu0 %v938, 80
  %v940 = vpop.permute.xlu0 %939
  %v942 = vmul.f32 %v913, %v940
  %v943 = vadd.f32 %v942, %v928
  %v944 = vtanh.pop %v943
  %946 = vrot.lane.b32.xlu0 %v944, 32
  %v947 = vpop.permute.xlu0 %946
  %v949 = vmul.f32 %v913, %v947
  %v951 = vrot.slane %v936, 4
  %952 = vrot.lane.b32.xlu0 %v951, 80
  %v953 = vpop.permute.xlu0 %952
  %v955 = vsel %vm339, %v953, %v825
  %v957 = vrot.slane %v930, 4
  %958 = vrot.lane.b32.xlu0 %v957, 112
  %v959 = vpop.permute.xlu0 %958
  %v961 = vsel %vm339, %v959, %v834
  %v963 = vrot.slane %v949, 4
  %964 = vrot.lane.b32.xlu0 %v963, 16
  %v965 = vpop.permute.xlu0 %964
  %v967 = vsel %vm319, %v965, %v843
  %v969 = vrot.slane %v943, 4
  %970 = vrot.lane.b32.xlu0 %v969, 48
  %v971 = vpop.permute.xlu0 %970
  %v973 = vsel %vm319, %v971, %v852
  %v974 = vsel %vm339, %v953, 0.0
  %v975 = vsel %vm319, %v965, 0.0
  %977 = vrot.lane.b32.xlu0 %v967, 16
  %v978 = vpop.permute.xlu0 %977
  %v980 = vsel %vm227, %v955, %v978
  %v981 = vpack.c.bf16 %v980, %v980
  %v983 = vsel %vm51, %v981, 0
  %985 = vmatprep.subr.bf16.mxu0 0
  %986 = vmatpush1.bf16.msra.mxu0 0
  %987 = vmatprep.subr.bf16.mxu0 0
  %988 = vmatpush1.bf16.msra.mxu0 0
  %989 = vmatprep.subr.bf16.mxu0 0
  %990 = vmatpush1.bf16.msra.mxu0 0
  %991 = vmatprep.subr.bf16.mxu0 0
  %992 = vmatpush1.bf16.msra.mxu0 0
  %993 = vmatprep.subr.bf16.mxu0 0
  %994 = vmatpush1.bf16.msra.mxu0 0
  %995 = vmatprep.subr.bf16.mxu0 0
  %996 = vmatpush1.bf16.msra.mxu0 0
  %997 = vmatprep.subr.bf16.mxu0 0
  %998 = vmatpush1.bf16.msra.mxu0 %v134
  %999 = vmatprep.subr.bf16.mxu0 0
  %1000 = vmatpush1.bf16.msra.mxu0 %v133
  %1001 = vmatprep.subr.bf16.mxu0 0
  %1002 = vmatpush2.bf16.msra.mxu0 0
  %1003 = vmatprep.subr.bf16.mxu0 0
  %1004 = vmatpush2.bf16.msra.mxu0 0
  %1005 = vmatprep.subr.bf16.mxu0 0
  %1006 = vmatpush2.bf16.msra.mxu0 0
  %1007 = vmatprep.subr.bf16.mxu0 0
  %1008 = vmatpush2.bf16.msra.mxu0 0
  %1009 = vmatprep.subr.bf16.mxu0 0
  %1010 = vmatpush2.bf16.msra.mxu0 0
  %1011 = vmatprep.subr.bf16.mxu0 0
  %1012 = vmatpush2.bf16.msra.mxu0 0
  %1013 = vmatprep.subr.bf16.mxu0 0
  %1014 = vmatpush2.bf16.msra.mxu0 0
  %1015 = vmatprep.subr.bf16.mxu0 0
  %1016 = vmatpush2.bf16.msra.mxu0 0
  %1017 = vmatprep.mubr.bf16.mxu0 0
  %1018 = vmatmul.mubr.bf16.gmra.mxu0 %v983
  %v1019 = vpop.f32.mrf.mxu0
  %v1020 = vadd.f32 0.0, %v1019
  %v1021 = vpop.f32.mrf.mxu0
  %v1022 = vpop.f32.mrf.mxu0
  %v1023 = vpop.f32.mrf.mxu0
  %1024 = vdwg.mxu0
  %v1026 = vrot.slane %v1020, 2
  %v1028 = vadd.f32 %v123, %v1026
  %v1029 = vxor.u32 %v1028, 2147483648
  %v1030 = vmul.f32 %v1029, 1.442695
  %v1031 = vpow.pop %v1030
  %v1032 = vadd.f32 %v1031, 1.0
  %v1033 = vrcp.pop %v1032
  %v1034 = vmul.f32 1.0, %v1033
  %v1035 = vtanh.pop %v1028
  %v1037 = vrot.slane %v961, 2
  %1038 = vrot.lane.b32.xlu0 %v1037, 16
  %v1039 = vpop.permute.xlu0 %1038
  %v1041 = vmul.f32 %v1034, %v1039
  %1043 = vrot.lane.b32.xlu0 %v1035, 96
  %v1044 = vpop.permute.xlu0 %1043
  %v1046 = vmul.f32 %v1034, %v1044
  %1048 = vrot.lane.b32.xlu0 %v1046, 16
  %v1049 = vpop.permute.xlu0 %1048
  %v1051 = vadd.f32 %v1041, %v1049
  %v1052 = vtanh.pop %v1051
  %1054 = vrot.lane.b32.xlu0 %v1052, 32
  %v1055 = vpop.permute.xlu0 %1054
  %v1057 = vmul.f32 %v1034, %v1055
  %v1059 = vrot.slane %v973, 2
  %1060 = vrot.lane.b32.xlu0 %v1059, 80
  %v1061 = vpop.permute.xlu0 %1060
  %v1063 = vmul.f32 %v1034, %v1061
  %v1064 = vadd.f32 %v1063, %v1049
  %v1065 = vtanh.pop %v1064
  %1067 = vrot.lane.b32.xlu0 %v1065, 32
  %v1068 = vpop.permute.xlu0 %1067
  %v1070 = vmul.f32 %v1034, %v1068
  %v1072 = vrot.slane %v1057, 6
  %1073 = vrot.lane.b32.xlu0 %v1072, 80
  %v1074 = vpop.permute.xlu0 %1073
  %v1076 = vsel %vm216, %v1074, 0.0
  %v1078 = vrot.slane %v1070, 6
  %1079 = vrot.lane.b32.xlu0 %v1078, 16
  %v1080 = vpop.permute.xlu0 %1079
  %v1082 = vsel %vm209, %v1080, 0.0
  %1084 = vrot.lane.b32.xlu0 %v1082, 16
  %v1085 = vpop.permute.xlu0 %1084
  %1088 = vrot.lane.b32.xlu0 %v358, 32
  %v1089 = vpop.permute.xlu0 %1088
  %1092 = vrot.lane.b32.xlu0 %v975, 48
  %v1093 = vpop.permute.xlu0 %1092
  %1096 = vrot.lane.b32.xlu0 %v489, 64
  %v1097 = vpop.permute.xlu0 %1096
  %1100 = vrot.lane.b32.xlu0 %v854, 80
  %v1101 = vpop.permute.xlu0 %1100
  %1104 = vrot.lane.b32.xlu0 %v620, 96
  %v1105 = vpop.permute.xlu0 %1104
  %1108 = vrot.lane.b32.xlu0 %v723, 80
  %v1109 = vpop.permute.xlu0 %1108
  %1112 = vrot.lane.b32.xlu0 %v621, 16
  %v1113 = vpop.permute.xlu0 %1112
  %1116 = vrot.lane.b32.xlu0 %v853, 32
  %v1117 = vpop.permute.xlu0 %1116
  %1120 = vrot.lane.b32.xlu0 %v490, 48
  %v1121 = vpop.permute.xlu0 %1120
  %1124 = vrot.lane.b32.xlu0 %v974, 64
  %v1125 = vpop.permute.xlu0 %1124
  %1128 = vrot.lane.b32.xlu0 %v359, 80
  %v1129 = vpop.permute.xlu0 %1128
  %1132 = vrot.lane.b32.xlu0 %v1076, 96
  %v1133 = vpop.permute.xlu0 %1132
  %v1135 = vsel %vm227, %v221, %v1085
  %v1136 = vsel %vm51, %v1135, %v1089
  %vm1137 = vcmask 392192
  %v1138 = vsel %vm1137, %v1136, %v1093
  %v1139 = vsel %vm112, %v1138, %v1097
  %vm1140 = vcmask 654336
  %v1141 = vsel %vm1140, %v1139, %v1101
  %vm1142 = vcmask 785408
  %v1143 = vsel %vm1142, %v1141, %v1105
  %vm1144 = vcmask 916480
  %v1145 = vsel %vm1144, %v1143, %v724
  %v1146 = vsel %vm227, %v1109, %v1113
  %v1147 = vsel %vm51, %v1146, %v1117
  %v1148 = vsel %vm1137, %v1147, %v1121
  %v1149 = vsel %vm112, %v1148, %v1125
  %v1150 = vsel %vm1140, %v1149, %v1129
  %v1151 = vsel %vm1142, %v1150, %v1133
  %v1152 = vsel %vm1144, %v1151, %v217
  %v1155 = vcombine.low %v1145, %v1152
  %v1157 = vunpack.c.l.s4 1983009808
  %v1158 = vunpack.c.0.s8 %v1157
  %v1159 = vlaneseq
  %v1160 = vshrl.u32 %v1159, 7
  %v1161 = vsub.s32 %v1158, %v1160
  %v1162 = vrot.slane %v1155, %v1161
  %1164 = vst [vmem:[%s5] sm:$0xf] %v1162
  // Predicated region
  $region22: #{lstm_encoder_pallas.1} parent=0 // pred_check
    _
  $region23: #{lstm_encoder_pallas.1} parent=0 // pred_check_branch
    %1166 = sbr.rel (0) target = $region25
  $region24: #{lstm_encoder_pallas.1} parent=0 // pred_region
    _
  $region25: #{lstm_encoder_pallas.1} parent=0 // pred_fallthru
    _
  // Predicated region
  $region26: #{lstm_encoder_pallas.1} parent=0 // pred_check
    _
  $region27: #{lstm_encoder_pallas.1} parent=0 // pred_check_branch
    %1168 = sbr.rel (0) target = $region29
  $region28: #{lstm_encoder_pallas.1} parent=0 // pred_region
    _
  $region29: #{lstm_encoder_pallas.1} parent=0 // pred_fallthru
    _

</llo_original>
